<compile_context>
chip_gen: v5e
topology: v5e:2x2
jax: 0.10.0
libtpu: 0.0.40
codegen_flags: <defaults>
</compile_context>

<pallas_src>
import functools

import jax
import jax.numpy as jnp
from jax.experimental import pallas as pl
from jax.experimental.pallas import tpu as pltpu


def sum_only_kernel(num_groups, x_ref, unq_ref, w_ref, b_ref, out_ref):
    i = pl.program_id(1)                    # reduction over point tiles

    @pl.when(i == 0)
    def _init():
        out_ref[...] = jnp.zeros_like(out_ref)

    tile_n = x_ref.shape[0]

    # ---- Linear (bias-free, BN scale pre-folded into w) + shift + ReLU ---- #
    x = jnp.dot(x_ref[...], w_ref[...],
                preferred_element_type=jnp.float32)              # [tile_n, C]
    x = jnp.maximum(x + b_ref[...], 0.0)

    # ---- segment sum via transposed one-hot matmul on the MXU ------------- #
    # unq_ref is [1, tile_n] (lane-dense); padded slots hold -1 -> all-zero
    # one-hot column, so zero-padded rows of x contribute nothing (and x is
    # finite everywhere, so there is no 0*NaN hazard).
    grp = jax.lax.broadcasted_iota(jnp.int32, (num_groups, tile_n), 0)
    onehot_t = (grp == unq_ref[...]).astype(jnp.float32)         # [P, tile_n]

    out_ref[...] += jax.lax.dot_general(
        onehot_t, x, (((1,), (0,)), ((), ())),
        preferred_element_type=jnp.float32)                      # [P, C]


def _auto_num_splits():
    """2 TensorCores per chip on v4/v5p/v7x; 1 on v5e/v6e (and as a fallback)."""
    try:
        kind = jax.devices()[0].device_kind.lower()
    except Exception:
        return 1
    if any(t in kind for t in ("v5e", "v5 lite", "v5lite",
                               "v6e", "v6 lite", "v6lite")):
        return 1
    if any(t in kind for t in ("7x", "v7", "v4", "v5p")):
        return 2
    return 1


def sum_only(inputs, unq_inv, num_groups, params, *, tile_n=2048,
             num_splits=None):
    n, c_in = inputs.shape
    c_out = params["w1"].shape[1]

    if num_splits is None:
        num_splits = _auto_num_splits()

    n_tiles = pl.cdiv(n, tile_n)
    num_splits = max(1, min(num_splits, n_tiles))
    tiles_per_split = pl.cdiv(n_tiles, num_splits)
    n_tiles_total = num_splits * tiles_per_split
    n_pad = n_tiles_total * tile_n

    # Zero-pad points (finite rows) and pad group ids with -1 (match no group);
    # this covers partial tiles and any phantom fully-OOB tiles in a split.
    inputs_p = jnp.pad(inputs.astype(jnp.float32), ((0, n_pad - n), (0, 0)))
    unq_lane = jnp.pad(unq_inv.astype(jnp.int32), (0, n_pad - n),
                       constant_values=-1).reshape(n_tiles_total, tile_n)

    # Fold the per-channel BN scale into the bias-free Linear weight.
    w1f = params["w1"].astype(jnp.float32) * params["s1"].astype(jnp.float32)
    b1 = params["b1"].astype(jnp.float32)

    kernel = functools.partial(sum_only_kernel, num_groups)

    def row_map(s, i):
        return (s * tiles_per_split + i, 0)

    def rep_map(s, i):
        return (0, 0)

    partials = pl.pallas_call(
        kernel,
        out_shape=jax.ShapeDtypeStruct((num_splits, num_groups, c_out),
                                       jnp.float32),
        grid_spec=pltpu.PrefetchScalarGridSpec(
            num_scalar_prefetch=0,
            grid=(num_splits, tiles_per_split),
            in_specs=[
                pl.BlockSpec((tile_n, c_in), row_map),   # point features
                pl.BlockSpec((1, tile_n), row_map),      # group ids (lane-dense)
                pl.BlockSpec((c_in, c_out), rep_map),    # folded weight (resident)
                pl.BlockSpec((1, c_out), rep_map),       # folded BN shift
            ],
            out_specs=pl.BlockSpec((None, num_groups, c_out),
                                   lambda s, i: (s, 0, 0)),   # split dim squeezed
        ),
        compiler_params=pltpu.CompilerParams(
            dimension_semantics=("parallel", "arbitrary"),
            vmem_limit_bytes=48 * 1024 * 1024),
    )(inputs_p, unq_lane, w1f, b1)

    if num_splits == 1:
        return partials[0]
    return partials.sum(axis=0)                               # [P, C]


def _bn_fold(keys, c, eps=1e-3):
    kg, kb, km, kv = keys
    gamma = 1.0 + 0.1 * jax.random.normal(kg, (1, c), jnp.float32)
    beta = 0.1 * jax.random.normal(kb, (1, c), jnp.float32)
    rmean = 0.1 * jax.random.normal(km, (1, c), jnp.float32)
    rvar = jnp.abs(jax.random.normal(kv, (1, c), jnp.float32)) + 0.5
    scale = gamma / jnp.sqrt(rvar + eps)
    shift = beta - rmean * scale
    return scale, shift


if __name__ == "__main__":
    N, C_IN, C_OUT, P = 200, 10, 32, 8      # points, in-ch, out-ch, pillars

    key = jax.random.PRNGKey(0)
    k = jax.random.split(key, 4)
    inputs = jax.random.normal(k[0], (N, C_IN), jnp.float32)
    unq_inv = jax.random.randint(k[1], (N,), 0, P, jnp.int32)

    # torch Linear weight, pre-transposed to [C_in, C_out]
    w1 = 0.1 * jax.random.normal(k[2], (C_IN, C_OUT), jnp.float32)
    kk = jax.random.split(k[3], 4)
    s1, b1 = _bn_fold(kk, C_OUT)
    params = dict(w1=w1, s1=s1, b1=b1)

    # pure-JAX reference (same inference-mode BN semantics)
    x = jnp.maximum(inputs @ w1 * s1 + b1, 0.0)
    ref = jax.ops.segment_sum(x, unq_inv, num_segments=P)

    # 1) default settings (big tile, core-count-aware splits)
    out_default = jax.block_until_ready(
        sum_only(inputs, unq_inv, P, params))

    # 2) small tile + 2 splits: exercises partial tiles, -1 id padding and the
    #    cross-split partial reduction
    out_split = jax.block_until_ready(
        sum_only(inputs, unq_inv, P, params, tile_n=128, num_splits=2))

    for out in (out_default, out_split):
        assert out.shape == (P, C_OUT) and out.dtype == jnp.float32
        assert jnp.allclose(out, ref, atol=1e-4, rtol=1e-4), float(
            jnp.max(jnp.abs(out - ref)))
    print("KERNEL_OK")
</pallas_src>

<mosaic_0001>
module attributes {stable_mosaic.version = 11 : i64} {
  func.func @sum_only_kernel(%arg0: i32, %arg1: i32, %arg2: memref<2048x10xf32, #tpu.memory_space<vmem>>, %arg3: memref<1x2048xi32, #tpu.memory_space<vmem>>, %arg4: memref<10x32xf32, #tpu.memory_space<vmem>>, %arg5: memref<1x32xf32, #tpu.memory_space<vmem>>, %arg6: memref<1x8x32xf32, #tpu.memory_space<vmem>>) attributes {dimension_semantics = [#tpu.dimension_semantics<parallel>, #tpu.dimension_semantics<arbitrary>], iteration_bounds = array<i64: 1, 1>, scalar_prefetch = 0 : i64, scratch_operands = 0 : i64, tpu.core_type = #tpu.core_type<tc>, window_params = [{transform_indices = @transform_0, window_bounds = array<i64: 2048, 10>}, {transform_indices = @transform_1, window_bounds = array<i64: 1, 2048>}, {pipeline_mode = #tpu.pipeline_mode<synchronous>, transform_indices = @transform_2, window_bounds = array<i64: 10, 32>}, {pipeline_mode = #tpu.pipeline_mode<synchronous>, transform_indices = @transform_3, window_bounds = array<i64: 1, 32>}, {transform_indices = @transform_4, window_bounds = array<i64: 1, 8, 32>}]} {
    %c0_i32 = arith.constant 0 : i32
    %0 = arith.cmpi eq, %arg1, %c0_i32 : i32
    %1 = arith.extui %0 : i1 to i32
    %c0_i32_0 = arith.constant 0 : i32
    %2 = arith.cmpi ne, %1, %c0_i32_0 : i32
    scf.if %2 {
      %cst_16 = arith.constant 0.000000e+00 : f32
      %24 = vector.broadcast %cst_16 : f32 to vector<8x32xf32>
      %c0_17 = arith.constant 0 : index
      %c0_18 = arith.constant 0 : index
      %c0_19 = arith.constant 0 : index
      %25 = vector.load %arg6[%c0_17, %c0_18, %c0_19] : memref<1x8x32xf32, #tpu.memory_space<vmem>>, vector<1x8x32xf32>
      %26 = vector.shape_cast %25 : vector<1x8x32xf32> to vector<8x32xf32>
      %27 = vector.shape_cast %24 : vector<8x32xf32> to vector<1x8x32xf32>
      tpu.vector_store %arg6[%c0_17, %c0_18, %c0_19], %27 {strides = array<i32>} : memref<1x8x32xf32, #tpu.memory_space<vmem>>, vector<1x8x32xf32>,
    } else {
    }
    %c0 = arith.constant 0 : index
    %c0_1 = arith.constant 0 : index
    %3 = vector.load %arg2[%c0, %c0_1] : memref<2048x10xf32, #tpu.memory_space<vmem>>, vector<2048x10xf32>
    %c0_2 = arith.constant 0 : index
    %c0_3 = arith.constant 0 : index
    %4 = vector.load %arg4[%c0_2, %c0_3] : memref<10x32xf32, #tpu.memory_space<vmem>>, vector<10x32xf32>
    %cst = arith.constant dense<0.000000e+00> : vector<2048x32xf32>
    %5 = tpu.matmul %3, %4, %cst {dimension_numbers = #tpu.dot_dimension_numbers<[1], [0], [0], [1], [0, 0, 1, 1], [], []>} : vector<2048x10xf32>, vector<10x32xf32>, vector<2048x32xf32> -> vector<2048x32xf32>
    %c0_4 = arith.constant 0 : index
    %c0_5 = arith.constant 0 : index
    %6 = vector.load %arg5[%c0_4, %c0_5] : memref<1x32xf32, #tpu.memory_space<vmem>>, vector<1x32xf32>
    %7 = vector.broadcast %6 : vector<1x32xf32> to vector<2048x32xf32>
    %8 = arith.addf %5, %7 : vector<2048x32xf32>
    %cst_6 = arith.constant 0.000000e+00 : f32
    %9 = vector.broadcast %cst_6 : f32 to vector<2048x32xf32>
    %10 = arith.maximumf %8, %9 : vector<2048x32xf32>
    %11 = tpu.iota {dimensions = array<i32: 0>} : vector<8x2048xi32>
    %c0_7 = arith.constant 0 : index
    %c0_8 = arith.constant 0 : index
    %12 = vector.load %arg3[%c0_7, %c0_8] : memref<1x2048xi32, #tpu.memory_space<vmem>>, vector<1x2048xi32>
    %13 = vector.broadcast %12 : vector<1x2048xi32> to vector<8x2048xi32>
    %14 = arith.cmpi eq, %11, %13 : vector<8x2048xi32>
    %15 = arith.extui %14 : vector<8x2048xi1> to vector<8x2048xi32>
    %16 = arith.sitofp %15 : vector<8x2048xi32> to vector<8x2048xf32>
    %c0_9 = arith.constant 0 : index
    %c0_10 = arith.constant 0 : index
    %c0_11 = arith.constant 0 : index
    %17 = vector.load %arg6[%c0_9, %c0_10, %c0_11] : memref<1x8x32xf32, #tpu.memory_space<vmem>>, vector<1x8x32xf32>
    %18 = vector.shape_cast %17 : vector<1x8x32xf32> to vector<8x32xf32>
    %cst_12 = arith.constant dense<0.000000e+00> : vector<8x32xf32>
    %19 = tpu.matmul %16, %10, %cst_12 {dimension_numbers = #tpu.dot_dimension_numbers<[1], [0], [0], [1], [0, 0, 1, 1], [], []>} : vector<8x2048xf32>, vector<2048x32xf32>, vector<8x32xf32> -> vector<8x32xf32>
    %20 = arith.addf %18, %19 : vector<8x32xf32>
    %c0_13 = arith.constant 0 : index
    %c0_14 = arith.constant 0 : index
    %c0_15 = arith.constant 0 : index
    %21 = vector.load %arg6[%c0_13, %c0_14, %c0_15] : memref<1x8x32xf32, #tpu.memory_space<vmem>>, vector<1x8x32xf32>
    %22 = vector.shape_cast %21 : vector<1x8x32xf32> to vector<8x32xf32>
    %23 = vector.shape_cast %20 : vector<8x32xf32> to vector<1x8x32xf32>
    tpu.vector_store %arg6[%c0_13, %c0_14, %c0_15], %23 {strides = array<i32>} : memref<1x8x32xf32, #tpu.memory_space<vmem>>, vector<1x8x32xf32>,
    return
  }
  func.func @transform_0(%arg0: i32, %arg1: i32) -> (i32, i32) {
    %c1_i32 = arith.constant 1 : i32
    %0 = arith.muli %arg0, %c1_i32 : i32
    %1 = arith.addi %0, %arg1 : i32
    %c0_i32 = arith.constant 0 : i32
    %c0_i32_0 = arith.constant 0 : i32
    return %1, %c0_i32 : i32, i32
  }
  func.func @transform_1(%arg0: i32, %arg1: i32) -> (i32, i32) {
    %c1_i32 = arith.constant 1 : i32
    %0 = arith.muli %arg0, %c1_i32 : i32
    %1 = arith.addi %0, %arg1 : i32
    %c0_i32 = arith.constant 0 : i32
    %c0_i32_0 = arith.constant 0 : i32
    return %1, %c0_i32 : i32, i32
  }
  func.func @transform_2(%arg0: i32, %arg1: i32) -> (i32, i32) {
    %c0_i32 = arith.constant 0 : i32
    %c0_i32_0 = arith.constant 0 : i32
    %c0_i32_1 = arith.constant 0 : i32
    return %c0_i32, %c0_i32_0 : i32, i32
  }
  func.func @transform_3(%arg0: i32, %arg1: i32) -> (i32, i32) {
    %c0_i32 = arith.constant 0 : i32
    %c0_i32_0 = arith.constant 0 : i32
    %c0_i32_1 = arith.constant 0 : i32
    return %c0_i32, %c0_i32_0 : i32, i32
  }
  func.func @transform_4(%arg0: i32, %arg1: i32) -> (i32, i32, i32) {
    %c0_i32 = arith.constant 0 : i32
    %c0_i32_0 = arith.constant 0 : i32
    %c0_i32_1 = arith.constant 0 : i32
    return %arg0, %c0_i32, %c0_i32_0 : i32, i32, i32
  }
}

</mosaic_0001>

<llo_original>
// kernel: tpu_custom_call.1
$region0: #{tpu_custom_call.1}
  #allocation0 [shape = 'u32[]', space=smem, size = 0x4, offset = 0x4, fixed_abs, tag = 'smem constant byte address 0x4 - core index']
  #allocation1 [shape = 'u32[72,128]{1,0:T(1,128)}', space=vmem, size = 0x9000, scoped, tag = 'internal scratch']
  %s0 = inlined_call_operand.vmem [shape: f32[2048,10], index: 0, kind: input, shape index: {}]
  %s1 = inlined_call_operand.vmem [shape: s32[1,2048], index: 1, kind: input, shape index: {}]
  %s2 = inlined_call_operand.vmem [shape: f32[10,32], index: 2, kind: input, shape index: {}]
  %s3 = inlined_call_operand.vmem [shape: f32[1,32], index: 3, kind: input, shape index: {}]
  %s4 = inlined_call_operand.hbm [shape: f32[1,8,32], index: 4, kind: output, shape index: {}]
  %s5 = sld [smem:[#allocation0]]
  $region30: #{tpu_custom_call.1} parent=0
    _
  %s7 = ssub.s32 1, %s5
  %s8 = scalar_select 0, %s7, %s5
  $region1: #{tpu_custom_call.1} parent=0
    #allocation2 [shape = 'u8[4096]{0}', space=vmem, size = 0x1000, scoped, tag = 'output window, operand 0, single buffered']
    #allocation3 [shape = 's32[1]{0}', space=sflag, size = 0x4, scoped, tag = 'scoped memory for tpu_custom_call.1']
    %9 = vsyncpa [#allocation3], 0
    // Predicated region
    $region2: #{tpu_custom_call.1} parent=1 // pred_check
      _
    $region3: #{tpu_custom_call.1} parent=1 // pred_check_branch
      %11 = sbr.rel (0) target = $region5
    $region4: #{tpu_custom_call.1} parent=1 // pred_region
      %s12 = sadd.s32 0, 0
      %s13 = smul.u32 256, %s12
      %p14 = scmp.lt.s32.totalorder %s13, 255
      %s15 = scalar_select %p14, %s13, 255
      %s16 = smul.addr %s15, 8
      %s17 = scalar_lea.vmem %s0, %s16
      %s18 = sadd.s32 0, 0
      %s19 = smul.u32 256, %s18
    $region5: #{tpu_custom_call.1} parent=1 // pred_fallthru
      _
    // Predicated region
    $region6: #{tpu_custom_call.1} parent=1 // pred_check
      _
    $region7: #{tpu_custom_call.1} parent=1 // pred_check_branch
      %21 = sbr.rel (0) target = $region9
    $region8: #{tpu_custom_call.1} parent=1 // pred_region
      %s22 = sadd.s32 0, 0
      %p23 = scmp.lt.s32.totalorder %s22, 0
      %s24 = scalar_select %p23, %s22, 0
      %s25 = smul.addr %s24, 16
      %s26 = scalar_lea.vmem %s1, %s25
      %s27 = sadd.s32 0, 0
    $region9: #{tpu_custom_call.1} parent=1 // pred_fallthru
      _
    // Predicated region
    $region10: #{tpu_custom_call.1} parent=1 // pred_check
      _
    $region11: #{tpu_custom_call.1} parent=1 // pred_check_branch
      %29 = sbr.rel (0) target = $region13
    $region12: #{tpu_custom_call.1} parent=1 // pred_region
      _
    $region13: #{tpu_custom_call.1} parent=1 // pred_fallthru
      _
    // Predicated region
    $region14: #{tpu_custom_call.1} parent=1 // pred_check
      _
    $region15: #{tpu_custom_call.1} parent=1 // pred_check_branch
      %31 = sbr.rel (0) target = $region17
    $region16: #{tpu_custom_call.1} parent=1 // pred_region
      _
    $region17: #{tpu_custom_call.1} parent=1 // pred_fallthru
      _
    %s32 = sadd.s32 0, 0
    %s33 = smul.u32 256, %s32
    %p34 = scmp.lt.s32.totalorder %s33, 255
    %s35 = scalar_select %p34, %s33, 255
    %s36 = smul.addr %s35, 8
    %s37 = scalar_lea.vmem %s0, %s36
    %s38 = sadd.s32 0, 0
    %p39 = scmp.lt.s32.totalorder %s38, 0
    %s40 = scalar_select %p39, %s38, 0
    %s41 = smul.addr %s40, 16
    %s42 = scalar_lea.vmem %s1, %s41
    %s43 = sadd.s32 0, 0
    %s44 = smul.u32 256, %s43
    %p45 = scmp.lt.s32.totalorder %s44, 255
    %s46 = scalar_select %p45, %s44, 255
    %s47 = smul.addr %s46, 8
    %s48 = scalar_lea.vmem %s0, %s47
    %s49 = sadd.s32 0, 0
    %s50 = smul.u32 256, %s49
    %s51 = sadd.s32 0, 0
    %p52 = scmp.lt.s32.totalorder %s51, 0
    %s53 = scalar_select %p52, %s51, 0
    %s54 = smul.addr %s53, 16
    %s55 = scalar_lea.vmem %s1, %s54
    %s56 = sadd.s32 0, 0
    %p57 = scmp.eq.s32.totalorder 0, 0
    // Predicated region
    $region18: #{tpu_custom_call.1} parent=1 // pred_check
      %p58 = pneg %p57
    $region19: #{tpu_custom_call.1} parent=1 // pred_check_branch
      %60 = sbr.rel (%p58) target = $region21
    $region20: #{tpu_custom_call.1} parent=1 // pred_region
      %vm61 = vcmask 261120
      %62 = vst.msk [vmem:[#allocation2] sm:$0xff] %vm61, 0.0
    $region21: #{tpu_custom_call.1} parent=1 // pred_fallthru
      _
    %v63 = vld [vmem:[%s48] sm:$0xff]
    %v64 = vld [vmem:[%s48 + $0x8] sm:$0xff]
    %v65 = vld [vmem:[%s48 + $0x10] sm:$0xff]
    %v66 = vld [vmem:[%s48 + $0x18] sm:$0xff]
    %v67 = vld [vmem:[%s48 + $0x20] sm:$0xff]
    %v68 = vld [vmem:[%s48 + $0x28] sm:$0xff]
    %v69 = vld [vmem:[%s48 + $0x30] sm:$0xff]
    %v70 = vld [vmem:[%s48 + $0x38] sm:$0xff]
    %v71 = vld [vmem:[%s48 + $0x40] sm:$0xff]
    %v72 = vld [vmem:[%s48 + $0x48] sm:$0xff]
    %v73 = vld [vmem:[%s48 + $0x50] sm:$0xff]
    %v74 = vld [vmem:[%s48 + $0x58] sm:$0xff]
    %v75 = vld [vmem:[%s48 + $0x60] sm:$0xff]
    %v76 = vld [vmem:[%s48 + $0x68] sm:$0xff]
    %v77 = vld [vmem:[%s48 + $0x70] sm:$0xff]
    %v78 = vld [vmem:[%s48 + $0x78] sm:$0xff]
    %v79 = vld [vmem:[%s48 + $0x80] sm:$0xff]
    %v80 = vld [vmem:[%s48 + $0x88] sm:$0xff]
    %v81 = vld [vmem:[%s48 + $0x90] sm:$0xff]
    %v82 = vld [vmem:[%s48 + $0x98] sm:$0xff]
    %v83 = vld [vmem:[%s48 + $0xa0] sm:$0xff]
    %v84 = vld [vmem:[%s48 + $0xa8] sm:$0xff]
    %v85 = vld [vmem:[%s48 + $0xb0] sm:$0xff]
    %v86 = vld [vmem:[%s48 + $0xb8] sm:$0xff]
    %v87 = vld [vmem:[%s48 + $0xc0] sm:$0xff]
    %v88 = vld [vmem:[%s48 + $0xc8] sm:$0xff]
    %v89 = vld [vmem:[%s48 + $0xd0] sm:$0xff]
    %v90 = vld [vmem:[%s48 + $0xd8] sm:$0xff]
    %v91 = vld [vmem:[%s48 + $0xe0] sm:$0xff]
    %v92 = vld [vmem:[%s48 + $0xe8] sm:$0xff]
    %v93 = vld [vmem:[%s48 + $0xf0] sm:$0xff]
    %v94 = vld [vmem:[%s48 + $0xf8] sm:$0xff]
    %v95 = vld [vmem:[%s48 + $0x100] sm:$0xff]
    %v96 = vld [vmem:[%s48 + $0x108] sm:$0xff]
    %v97 = vld [vmem:[%s48 + $0x110] sm:$0xff]
    %v98 = vld [vmem:[%s48 + $0x118] sm:$0xff]
    %v99 = vld [vmem:[%s48 + $0x120] sm:$0xff]
    %v100 = vld [vmem:[%s48 + $0x128] sm:$0xff]
    %v101 = vld [vmem:[%s48 + $0x130] sm:$0xff]
    %v102 = vld [vmem:[%s48 + $0x138] sm:$0xff]
    %v103 = vld [vmem:[%s48 + $0x140] sm:$0xff]
    %v104 = vld [vmem:[%s48 + $0x148] sm:$0xff]
    %v105 = vld [vmem:[%s48 + $0x150] sm:$0xff]
    %v106 = vld [vmem:[%s48 + $0x158] sm:$0xff]
    %v107 = vld [vmem:[%s48 + $0x160] sm:$0xff]
    %v108 = vld [vmem:[%s48 + $0x168] sm:$0xff]
    %v109 = vld [vmem:[%s48 + $0x170] sm:$0xff]
    %v110 = vld [vmem:[%s48 + $0x178] sm:$0xff]
    %v111 = vld [vmem:[%s48 + $0x180] sm:$0xff]
    %v112 = vld [vmem:[%s48 + $0x188] sm:$0xff]
    %v113 = vld [vmem:[%s48 + $0x190] sm:$0xff]
    %v114 = vld [vmem:[%s48 + $0x198] sm:$0xff]
    %v115 = vld [vmem:[%s48 + $0x1a0] sm:$0xff]
    %v116 = vld [vmem:[%s48 + $0x1a8] sm:$0xff]
    %v117 = vld [vmem:[%s48 + $0x1b0] sm:$0xff]
    %v118 = vld [vmem:[%s48 + $0x1b8] sm:$0xff]
    %v119 = vld [vmem:[%s48 + $0x1c0] sm:$0xff]
    %v120 = vld [vmem:[%s48 + $0x1c8] sm:$0xff]
    %v121 = vld [vmem:[%s48 + $0x1d0] sm:$0xff]
    %v122 = vld [vmem:[%s48 + $0x1d8] sm:$0xff]
    %v123 = vld [vmem:[%s48 + $0x1e0] sm:$0xff]
    %v124 = vld [vmem:[%s48 + $0x1e8] sm:$0xff]
    %v125 = vld [vmem:[%s48 + $0x1f0] sm:$0xff]
    %v126 = vld [vmem:[%s48 + $0x1f8] sm:$0xff]
    %v127 = vld [vmem:[%s48 + $0x200] sm:$0xff]
    %v128 = vld [vmem:[%s48 + $0x208] sm:$0xff]
    %v129 = vld [vmem:[%s48 + $0x210] sm:$0xff]
    %v130 = vld [vmem:[%s48 + $0x218] sm:$0xff]
    %v131 = vld [vmem:[%s48 + $0x220] sm:$0xff]
    %v132 = vld [vmem:[%s48 + $0x228] sm:$0xff]
    %v133 = vld [vmem:[%s48 + $0x230] sm:$0xff]
    %v134 = vld [vmem:[%s48 + $0x238] sm:$0xff]
    %v135 = vld [vmem:[%s48 + $0x240] sm:$0xff]
    %v136 = vld [vmem:[%s48 + $0x248] sm:$0xff]
    %v137 = vld [vmem:[%s48 + $0x250] sm:$0xff]
    %v138 = vld [vmem:[%s48 + $0x258] sm:$0xff]
    %v139 = vld [vmem:[%s48 + $0x260] sm:$0xff]
    %v140 = vld [vmem:[%s48 + $0x268] sm:$0xff]
    %v141 = vld [vmem:[%s48 + $0x270] sm:$0xff]
    %v142 = vld [vmem:[%s48 + $0x278] sm:$0xff]
    %v143 = vld [vmem:[%s48 + $0x280] sm:$0xff]
    %v144 = vld [vmem:[%s48 + $0x288] sm:$0xff]
    %v145 = vld [vmem:[%s48 + $0x290] sm:$0xff]
    %v146 = vld [vmem:[%s48 + $0x298] sm:$0xff]
    %v147 = vld [vmem:[%s48 + $0x2a0] sm:$0xff]
    %v148 = vld [vmem:[%s48 + $0x2a8] sm:$0xff]
    %v149 = vld [vmem:[%s48 + $0x2b0] sm:$0xff]
    %v150 = vld [vmem:[%s48 + $0x2b8] sm:$0xff]
    %v151 = vld [vmem:[%s48 + $0x2c0] sm:$0xff]
    %v152 = vld [vmem:[%s48 + $0x2c8] sm:$0xff]
    %v153 = vld [vmem:[%s48 + $0x2d0] sm:$0xff]
    %v154 = vld [vmem:[%s48 + $0x2d8] sm:$0xff]
    %v155 = vld [vmem:[%s48 + $0x2e0] sm:$0xff]
    %v156 = vld [vmem:[%s48 + $0x2e8] sm:$0xff]
    %v157 = vld [vmem:[%s48 + $0x2f0] sm:$0xff]
    %v158 = vld [vmem:[%s48 + $0x2f8] sm:$0xff]
    %v159 = vld [vmem:[%s48 + $0x300] sm:$0xff]
    %v160 = vld [vmem:[%s48 + $0x308] sm:$0xff]
    %v161 = vld [vmem:[%s48 + $0x310] sm:$0xff]
    %v162 = vld [vmem:[%s48 + $0x318] sm:$0xff]
    %v163 = vld [vmem:[%s48 + $0x320] sm:$0xff]
    %v164 = vld [vmem:[%s48 + $0x328] sm:$0xff]
    %v165 = vld [vmem:[%s48 + $0x330] sm:$0xff]
    %v166 = vld [vmem:[%s48 + $0x338] sm:$0xff]
    %v167 = vld [vmem:[%s48 + $0x340] sm:$0xff]
    %v168 = vld [vmem:[%s48 + $0x348] sm:$0xff]
    %v169 = vld [vmem:[%s48 + $0x350] sm:$0xff]
    %v170 = vld [vmem:[%s48 + $0x358] sm:$0xff]
    %v171 = vld [vmem:[%s48 + $0x360] sm:$0xff]
    %v172 = vld [vmem:[%s48 + $0x368] sm:$0xff]
    %v173 = vld [vmem:[%s48 + $0x370] sm:$0xff]
    %v174 = vld [vmem:[%s48 + $0x378] sm:$0xff]
    %v175 = vld [vmem:[%s48 + $0x380] sm:$0xff]
    %v176 = vld [vmem:[%s48 + $0x388] sm:$0xff]
    %v177 = vld [vmem:[%s48 + $0x390] sm:$0xff]
    %v178 = vld [vmem:[%s48 + $0x398] sm:$0xff]
    %v179 = vld [vmem:[%s48 + $0x3a0] sm:$0xff]
    %v180 = vld [vmem:[%s48 + $0x3a8] sm:$0xff]
    %v181 = vld [vmem:[%s48 + $0x3b0] sm:$0xff]
    %v182 = vld [vmem:[%s48 + $0x3b8] sm:$0xff]
    %v183 = vld [vmem:[%s48 + $0x3c0] sm:$0xff]
    %v184 = vld [vmem:[%s48 + $0x3c8] sm:$0xff]
    %v185 = vld [vmem:[%s48 + $0x3d0] sm:$0xff]
    %v186 = vld [vmem:[%s48 + $0x3d8] sm:$0xff]
    %v187 = vld [vmem:[%s48 + $0x3e0] sm:$0xff]
    %v188 = vld [vmem:[%s48 + $0x3e8] sm:$0xff]
    %v189 = vld [vmem:[%s48 + $0x3f0] sm:$0xff]
    %v190 = vld [vmem:[%s48 + $0x3f8] sm:$0xff]
    %v191 = vld [vmem:[%s48 + $0x400] sm:$0xff]
    %v192 = vld [vmem:[%s48 + $0x408] sm:$0xff]
    %v193 = vld [vmem:[%s48 + $0x410] sm:$0xff]
    %v194 = vld [vmem:[%s48 + $0x418] sm:$0xff]
    %v195 = vld [vmem:[%s48 + $0x420] sm:$0xff]
    %v196 = vld [vmem:[%s48 + $0x428] sm:$0xff]
    %v197 = vld [vmem:[%s48 + $0x430] sm:$0xff]
    %v198 = vld [vmem:[%s48 + $0x438] sm:$0xff]
    %v199 = vld [vmem:[%s48 + $0x440] sm:$0xff]
    %v200 = vld [vmem:[%s48 + $0x448] sm:$0xff]
    %v201 = vld [vmem:[%s48 + $0x450] sm:$0xff]
    %v202 = vld [vmem:[%s48 + $0x458] sm:$0xff]
    %v203 = vld [vmem:[%s48 + $0x460] sm:$0xff]
    %v204 = vld [vmem:[%s48 + $0x468] sm:$0xff]
    %v205 = vld [vmem:[%s48 + $0x470] sm:$0xff]
    %v206 = vld [vmem:[%s48 + $0x478] sm:$0xff]
    %v207 = vld [vmem:[%s48 + $0x480] sm:$0xff]
    %v208 = vld [vmem:[%s48 + $0x488] sm:$0xff]
    %v209 = vld [vmem:[%s48 + $0x490] sm:$0xff]
    %v210 = vld [vmem:[%s48 + $0x498] sm:$0xff]
    %v211 = vld [vmem:[%s48 + $0x4a0] sm:$0xff]
    %v212 = vld [vmem:[%s48 + $0x4a8] sm:$0xff]
    %v213 = vld [vmem:[%s48 + $0x4b0] sm:$0xff]
    %v214 = vld [vmem:[%s48 + $0x4b8] sm:$0xff]
    %v215 = vld [vmem:[%s48 + $0x4c0] sm:$0xff]
    %v216 = vld [vmem:[%s48 + $0x4c8] sm:$0xff]
    %v217 = vld [vmem:[%s48 + $0x4d0] sm:$0xff]
    %v218 = vld [vmem:[%s48 + $0x4d8] sm:$0xff]
    %v219 = vld [vmem:[%s48 + $0x4e0] sm:$0xff]
    %v220 = vld [vmem:[%s48 + $0x4e8] sm:$0xff]
    %v221 = vld [vmem:[%s48 + $0x4f0] sm:$0xff]
    %v222 = vld [vmem:[%s48 + $0x4f8] sm:$0xff]
    %v223 = vld [vmem:[%s48 + $0x500] sm:$0xff]
    %v224 = vld [vmem:[%s48 + $0x508] sm:$0xff]
    %v225 = vld [vmem:[%s48 + $0x510] sm:$0xff]
    %v226 = vld [vmem:[%s48 + $0x518] sm:$0xff]
    %v227 = vld [vmem:[%s48 + $0x520] sm:$0xff]
    %v228 = vld [vmem:[%s48 + $0x528] sm:$0xff]
    %v229 = vld [vmem:[%s48 + $0x530] sm:$0xff]
    %v230 = vld [vmem:[%s48 + $0x538] sm:$0xff]
    %v231 = vld [vmem:[%s48 + $0x540] sm:$0xff]
    %v232 = vld [vmem:[%s48 + $0x548] sm:$0xff]
    %v233 = vld [vmem:[%s48 + $0x550] sm:$0xff]
    %v234 = vld [vmem:[%s48 + $0x558] sm:$0xff]
    %v235 = vld [vmem:[%s48 + $0x560] sm:$0xff]
    %v236 = vld [vmem:[%s48 + $0x568] sm:$0xff]
    %v237 = vld [vmem:[%s48 + $0x570] sm:$0xff]
    %v238 = vld [vmem:[%s48 + $0x578] sm:$0xff]
    %v239 = vld [vmem:[%s48 + $0x580] sm:$0xff]
    %v240 = vld [vmem:[%s48 + $0x588] sm:$0xff]
    %v241 = vld [vmem:[%s48 + $0x590] sm:$0xff]
    %v242 = vld [vmem:[%s48 + $0x598] sm:$0xff]
    %v243 = vld [vmem:[%s48 + $0x5a0] sm:$0xff]
    %v244 = vld [vmem:[%s48 + $0x5a8] sm:$0xff]
    %v245 = vld [vmem:[%s48 + $0x5b0] sm:$0xff]
    %v246 = vld [vmem:[%s48 + $0x5b8] sm:$0xff]
    %v247 = vld [vmem:[%s48 + $0x5c0] sm:$0xff]
    %v248 = vld [vmem:[%s48 + $0x5c8] sm:$0xff]
    %v249 = vld [vmem:[%s48 + $0x5d0] sm:$0xff]
    %v250 = vld [vmem:[%s48 + $0x5d8] sm:$0xff]
    %v251 = vld [vmem:[%s48 + $0x5e0] sm:$0xff]
    %v252 = vld [vmem:[%s48 + $0x5e8] sm:$0xff]
    %v253 = vld [vmem:[%s48 + $0x5f0] sm:$0xff]
    %v254 = vld [vmem:[%s48 + $0x5f8] sm:$0xff]
    %v255 = vld [vmem:[%s48 + $0x600] sm:$0xff]
    %v256 = vld [vmem:[%s48 + $0x608] sm:$0xff]
    %v257 = vld [vmem:[%s48 + $0x610] sm:$0xff]
    %v258 = vld [vmem:[%s48 + $0x618] sm:$0xff]
    %v259 = vld [vmem:[%s48 + $0x620] sm:$0xff]
    %v260 = vld [vmem:[%s48 + $0x628] sm:$0xff]
    %v261 = vld [vmem:[%s48 + $0x630] sm:$0xff]
    %v262 = vld [vmem:[%s48 + $0x638] sm:$0xff]
    %v263 = vld [vmem:[%s48 + $0x640] sm:$0xff]
    %v264 = vld [vmem:[%s48 + $0x648] sm:$0xff]
    %v265 = vld [vmem:[%s48 + $0x650] sm:$0xff]
    %v266 = vld [vmem:[%s48 + $0x658] sm:$0xff]
    %v267 = vld [vmem:[%s48 + $0x660] sm:$0xff]
    %v268 = vld [vmem:[%s48 + $0x668] sm:$0xff]
    %v269 = vld [vmem:[%s48 + $0x670] sm:$0xff]
    %v270 = vld [vmem:[%s48 + $0x678] sm:$0xff]
    %v271 = vld [vmem:[%s48 + $0x680] sm:$0xff]
    %v272 = vld [vmem:[%s48 + $0x688] sm:$0xff]
    %v273 = vld [vmem:[%s48 + $0x690] sm:$0xff]
    %v274 = vld [vmem:[%s48 + $0x698] sm:$0xff]
    %v275 = vld [vmem:[%s48 + $0x6a0] sm:$0xff]
    %v276 = vld [vmem:[%s48 + $0x6a8] sm:$0xff]
    %v277 = vld [vmem:[%s48 + $0x6b0] sm:$0xff]
    %v278 = vld [vmem:[%s48 + $0x6b8] sm:$0xff]
    %v279 = vld [vmem:[%s48 + $0x6c0] sm:$0xff]
    %v280 = vld [vmem:[%s48 + $0x6c8] sm:$0xff]
    %v281 = vld [vmem:[%s48 + $0x6d0] sm:$0xff]
    %v282 = vld [vmem:[%s48 + $0x6d8] sm:$0xff]
    %v283 = vld [vmem:[%s48 + $0x6e0] sm:$0xff]
    %v284 = vld [vmem:[%s48 + $0x6e8] sm:$0xff]
    %v285 = vld [vmem:[%s48 + $0x6f0] sm:$0xff]
    %v286 = vld [vmem:[%s48 + $0x6f8] sm:$0xff]
    %v287 = vld [vmem:[%s48 + $0x700] sm:$0xff]
    %v288 = vld [vmem:[%s48 + $0x708] sm:$0xff]
    %v289 = vld [vmem:[%s48 + $0x710] sm:$0xff]
    %v290 = vld [vmem:[%s48 + $0x718] sm:$0xff]
    %v291 = vld [vmem:[%s48 + $0x720] sm:$0xff]
    %v292 = vld [vmem:[%s48 + $0x728] sm:$0xff]
    %v293 = vld [vmem:[%s48 + $0x730] sm:$0xff]
    %v294 = vld [vmem:[%s48 + $0x738] sm:$0xff]
    %v295 = vld [vmem:[%s48 + $0x740] sm:$0xff]
    %v296 = vld [vmem:[%s48 + $0x748] sm:$0xff]
    %v297 = vld [vmem:[%s48 + $0x750] sm:$0xff]
    %v298 = vld [vmem:[%s48 + $0x758] sm:$0xff]
    %v299 = vld [vmem:[%s48 + $0x760] sm:$0xff]
    %v300 = vld [vmem:[%s48 + $0x768] sm:$0xff]
    %v301 = vld [vmem:[%s48 + $0x770] sm:$0xff]
    %v302 = vld [vmem:[%s48 + $0x778] sm:$0xff]
    %v303 = vld [vmem:[%s48 + $0x780] sm:$0xff]
    %v304 = vld [vmem:[%s48 + $0x788] sm:$0xff]
    %v305 = vld [vmem:[%s48 + $0x790] sm:$0xff]
    %v306 = vld [vmem:[%s48 + $0x798] sm:$0xff]
    %v307 = vld [vmem:[%s48 + $0x7a0] sm:$0xff]
    %v308 = vld [vmem:[%s48 + $0x7a8] sm:$0xff]
    %v309 = vld [vmem:[%s48 + $0x7b0] sm:$0xff]
    %v310 = vld [vmem:[%s48 + $0x7b8] sm:$0xff]
    %v311 = vld [vmem:[%s48 + $0x7c0] sm:$0xff]
    %v312 = vld [vmem:[%s48 + $0x7c8] sm:$0xff]
    %v313 = vld [vmem:[%s48 + $0x7d0] sm:$0xff]
    %v314 = vld [vmem:[%s48 + $0x7d8] sm:$0xff]
    %v315 = vld [vmem:[%s48 + $0x7e0] sm:$0xff]
    %v316 = vld [vmem:[%s48 + $0x7e8] sm:$0xff]
    %v317 = vld [vmem:[%s48 + $0x7f0] sm:$0xff]
    %v318 = vld [vmem:[%s48 + $0x7f8] sm:$0xff]
    %v319 = vld [vmem:[%s2] sm:$0xff]
    %v320 = vld [vmem:[%s2 + $0x8] sm:$0x3]
    %v321 = vld [vmem:[%s3] sm:$0x1]
    %v323 = vperm.slane %v321, 0
    %vm325 = vcmask 80896
    %v327 = vsel %vm325, %v63, 0
    %v330 = vsel %vm325, %v64, 0
    %v333 = vsel %vm325, %v65, 0
    %v336 = vsel %vm325, %v66, 0
    %v339 = vsel %vm325, %v67, 0
    %v342 = vsel %vm325, %v68, 0
    %v345 = vsel %vm325, %v69, 0
    %v348 = vsel %vm325, %v70, 0
    %v351 = vsel %vm325, %v71, 0
    %v354 = vsel %vm325, %v72, 0
    %v357 = vsel %vm325, %v73, 0
    %v360 = vsel %vm325, %v74, 0
    %v363 = vsel %vm325, %v75, 0
    %v366 = vsel %vm325, %v76, 0
    %v369 = vsel %vm325, %v77, 0
    %v372 = vsel %vm325, %v78, 0
    %v375 = vsel %vm325, %v79, 0
    %v378 = vsel %vm325, %v80, 0
    %v381 = vsel %vm325, %v81, 0
    %v384 = vsel %vm325, %v82, 0
    %v387 = vsel %vm325, %v83, 0
    %v390 = vsel %vm325, %v84, 0
    %v393 = vsel %vm325, %v85, 0
    %v396 = vsel %vm325, %v86, 0
    %v399 = vsel %vm325, %v87, 0
    %v402 = vsel %vm325, %v88, 0
    %v405 = vsel %vm325, %v89, 0
    %v408 = vsel %vm325, %v90, 0
    %v411 = vsel %vm325, %v91, 0
    %v414 = vsel %vm325, %v92, 0
    %v417 = vsel %vm325, %v93, 0
    %v420 = vsel %vm325, %v94, 0
    %v423 = vsel %vm325, %v95, 0
    %v426 = vsel %vm325, %v96, 0
    %v429 = vsel %vm325, %v97, 0
    %v432 = vsel %vm325, %v98, 0
    %v435 = vsel %vm325, %v99, 0
    %v438 = vsel %vm325, %v100, 0
    %v441 = vsel %vm325, %v101, 0
    %v444 = vsel %vm325, %v102, 0
    %v447 = vsel %vm325, %v103, 0
    %v450 = vsel %vm325, %v104, 0
    %v453 = vsel %vm325, %v105, 0
    %v456 = vsel %vm325, %v106, 0
    %v459 = vsel %vm325, %v107, 0
    %v462 = vsel %vm325, %v108, 0
    %v465 = vsel %vm325, %v109, 0
    %v468 = vsel %vm325, %v110, 0
    %v471 = vsel %vm325, %v111, 0
    %v474 = vsel %vm325, %v112, 0
    %v477 = vsel %vm325, %v113, 0
    %v480 = vsel %vm325, %v114, 0
    %v483 = vsel %vm325, %v115, 0
    %v486 = vsel %vm325, %v116, 0
    %v489 = vsel %vm325, %v117, 0
    %v492 = vsel %vm325, %v118, 0
    %v495 = vsel %vm325, %v119, 0
    %v498 = vsel %vm325, %v120, 0
    %v501 = vsel %vm325, %v121, 0
    %v504 = vsel %vm325, %v122, 0
    %v507 = vsel %vm325, %v123, 0
    %v510 = vsel %vm325, %v124, 0
    %v513 = vsel %vm325, %v125, 0
    %v516 = vsel %vm325, %v126, 0
    %v519 = vsel %vm325, %v127, 0
    %v522 = vsel %vm325, %v128, 0
    %v525 = vsel %vm325, %v129, 0
    %v528 = vsel %vm325, %v130, 0
    %v531 = vsel %vm325, %v131, 0
    %v534 = vsel %vm325, %v132, 0
    %v537 = vsel %vm325, %v133, 0
    %v540 = vsel %vm325, %v134, 0
    %v543 = vsel %vm325, %v135, 0
    %v546 = vsel %vm325, %v136, 0
    %v549 = vsel %vm325, %v137, 0
    %v552 = vsel %vm325, %v138, 0
    %v555 = vsel %vm325, %v139, 0
    %v558 = vsel %vm325, %v140, 0
    %v561 = vsel %vm325, %v141, 0
    %v564 = vsel %vm325, %v142, 0
    %v567 = vsel %vm325, %v143, 0
    %v570 = vsel %vm325, %v144, 0
    %v573 = vsel %vm325, %v145, 0
    %v576 = vsel %vm325, %v146, 0
    %v579 = vsel %vm325, %v147, 0
    %v582 = vsel %vm325, %v148, 0
    %v585 = vsel %vm325, %v149, 0
    %v588 = vsel %vm325, %v150, 0
    %v591 = vsel %vm325, %v151, 0
    %v594 = vsel %vm325, %v152, 0
    %v597 = vsel %vm325, %v153, 0
    %v600 = vsel %vm325, %v154, 0
    %v603 = vsel %vm325, %v155, 0
    %v606 = vsel %vm325, %v156, 0
    %v609 = vsel %vm325, %v157, 0
    %v612 = vsel %vm325, %v158, 0
    %v615 = vsel %vm325, %v159, 0
    %v618 = vsel %vm325, %v160, 0
    %v621 = vsel %vm325, %v161, 0
    %v624 = vsel %vm325, %v162, 0
    %v627 = vsel %vm325, %v163, 0
    %v630 = vsel %vm325, %v164, 0
    %v633 = vsel %vm325, %v165, 0
    %v636 = vsel %vm325, %v166, 0
    %v639 = vsel %vm325, %v167, 0
    %v642 = vsel %vm325, %v168, 0
    %v645 = vsel %vm325, %v169, 0
    %v648 = vsel %vm325, %v170, 0
    %v651 = vsel %vm325, %v171, 0
    %v654 = vsel %vm325, %v172, 0
    %v657 = vsel %vm325, %v173, 0
    %v660 = vsel %vm325, %v174, 0
    %v663 = vsel %vm325, %v175, 0
    %v666 = vsel %vm325, %v176, 0
    %v669 = vsel %vm325, %v177, 0
    %v672 = vsel %vm325, %v178, 0
    %v675 = vsel %vm325, %v179, 0
    %v678 = vsel %vm325, %v180, 0
    %v681 = vsel %vm325, %v181, 0
    %v684 = vsel %vm325, %v182, 0
    %v687 = vsel %vm325, %v183, 0
    %v690 = vsel %vm325, %v184, 0
    %v693 = vsel %vm325, %v185, 0
    %v696 = vsel %vm325, %v186, 0
    %v699 = vsel %vm325, %v187, 0
    %v702 = vsel %vm325, %v188, 0
    %v705 = vsel %vm325, %v189, 0
    %v708 = vsel %vm325, %v190, 0
    %v711 = vsel %vm325, %v191, 0
    %v714 = vsel %vm325, %v192, 0
    %v717 = vsel %vm325, %v193, 0
    %v720 = vsel %vm325, %v194, 0
    %v723 = vsel %vm325, %v195, 0
    %v726 = vsel %vm325, %v196, 0
    %v729 = vsel %vm325, %v197, 0
    %v732 = vsel %vm325, %v198, 0
    %v735 = vsel %vm325, %v199, 0
    %v738 = vsel %vm325, %v200, 0
    %v741 = vsel %vm325, %v201, 0
    %v744 = vsel %vm325, %v202, 0
    %v747 = vsel %vm325, %v203, 0
    %v750 = vsel %vm325, %v204, 0
    %v753 = vsel %vm325, %v205, 0
    %v756 = vsel %vm325, %v206, 0
    %v759 = vsel %vm325, %v207, 0
    %v762 = vsel %vm325, %v208, 0
    %v765 = vsel %vm325, %v209, 0
    %v768 = vsel %vm325, %v210, 0
    %v771 = vsel %vm325, %v211, 0
    %v774 = vsel %vm325, %v212, 0
    %v777 = vsel %vm325, %v213, 0
    %v780 = vsel %vm325, %v214, 0
    %v783 = vsel %vm325, %v215, 0
    %v786 = vsel %vm325, %v216, 0
    %v789 = vsel %vm325, %v217, 0
    %v792 = vsel %vm325, %v218, 0
    %v795 = vsel %vm325, %v219, 0
    %v798 = vsel %vm325, %v220, 0
    %v801 = vsel %vm325, %v221, 0
    %v804 = vsel %vm325, %v222, 0
    %v807 = vsel %vm325, %v223, 0
    %v810 = vsel %vm325, %v224, 0
    %v813 = vsel %vm325, %v225, 0
    %v816 = vsel %vm325, %v226, 0
    %v819 = vsel %vm325, %v227, 0
    %v822 = vsel %vm325, %v228, 0
    %v825 = vsel %vm325, %v229, 0
    %v828 = vsel %vm325, %v230, 0
    %v831 = vsel %vm325, %v231, 0
    %v834 = vsel %vm325, %v232, 0
    %v837 = vsel %vm325, %v233, 0
    %v840 = vsel %vm325, %v234, 0
    %v843 = vsel %vm325, %v235, 0
    %v846 = vsel %vm325, %v236, 0
    %v849 = vsel %vm325, %v237, 0
    %v852 = vsel %vm325, %v238, 0
    %v855 = vsel %vm325, %v239, 0
    %v858 = vsel %vm325, %v240, 0
    %v861 = vsel %vm325, %v241, 0
    %v864 = vsel %vm325, %v242, 0
    %v867 = vsel %vm325, %v243, 0
    %v870 = vsel %vm325, %v244, 0
    %v873 = vsel %vm325, %v245, 0
    %v876 = vsel %vm325, %v246, 0
    %v879 = vsel %vm325, %v247, 0
    %v882 = vsel %vm325, %v248, 0
    %v885 = vsel %vm325, %v249, 0
    %v888 = vsel %vm325, %v250, 0
    %v891 = vsel %vm325, %v251, 0
    %v894 = vsel %vm325, %v252, 0
    %v897 = vsel %vm325, %v253, 0
    %v900 = vsel %vm325, %v254, 0
    %v903 = vsel %vm325, %v255, 0
    %v906 = vsel %vm325, %v256, 0
    %v909 = vsel %vm325, %v257, 0
    %v912 = vsel %vm325, %v258, 0
    %v915 = vsel %vm325, %v259, 0
    %v918 = vsel %vm325, %v260, 0
    %v921 = vsel %vm325, %v261, 0
    %v924 = vsel %vm325, %v262, 0
    %v927 = vsel %vm325, %v263, 0
    %v930 = vsel %vm325, %v264, 0
    %v933 = vsel %vm325, %v265, 0
    %v936 = vsel %vm325, %v266, 0
    %v939 = vsel %vm325, %v267, 0
    %v942 = vsel %vm325, %v268, 0
    %v945 = vsel %vm325, %v269, 0
    %v948 = vsel %vm325, %v270, 0
    %v951 = vsel %vm325, %v271, 0
    %v954 = vsel %vm325, %v272, 0
    %v957 = vsel %vm325, %v273, 0
    %v960 = vsel %vm325, %v274, 0
    %v963 = vsel %vm325, %v275, 0
    %v966 = vsel %vm325, %v276, 0
    %v969 = vsel %vm325, %v277, 0
    %v972 = vsel %vm325, %v278, 0
    %v975 = vsel %vm325, %v279, 0
    %v978 = vsel %vm325, %v280, 0
    %v981 = vsel %vm325, %v281, 0
    %v984 = vsel %vm325, %v282, 0
    %v987 = vsel %vm325, %v283, 0
    %v990 = vsel %vm325, %v284, 0
    %v993 = vsel %vm325, %v285, 0
    %v996 = vsel %vm325, %v286, 0
    %v999 = vsel %vm325, %v287, 0
    %v1002 = vsel %vm325, %v288, 0
    %v1005 = vsel %vm325, %v289, 0
    %v1008 = vsel %vm325, %v290, 0
    %v1011 = vsel %vm325, %v291, 0
    %v1014 = vsel %vm325, %v292, 0
    %v1017 = vsel %vm325, %v293, 0
    %v1020 = vsel %vm325, %v294, 0
    %v1023 = vsel %vm325, %v295, 0
    %v1026 = vsel %vm325, %v296, 0
    %v1029 = vsel %vm325, %v297, 0
    %v1032 = vsel %vm325, %v298, 0
    %v1035 = vsel %vm325, %v299, 0
    %v1038 = vsel %vm325, %v300, 0
    %v1041 = vsel %vm325, %v301, 0
    %v1044 = vsel %vm325, %v302, 0
    %v1047 = vsel %vm325, %v303, 0
    %v1050 = vsel %vm325, %v304, 0
    %v1053 = vsel %vm325, %v305, 0
    %v1056 = vsel %vm325, %v306, 0
    %v1059 = vsel %vm325, %v307, 0
    %v1062 = vsel %vm325, %v308, 0
    %v1065 = vsel %vm325, %v309, 0
    %v1068 = vsel %vm325, %v310, 0
    %v1071 = vsel %vm325, %v311, 0
    %v1074 = vsel %vm325, %v312, 0
    %v1077 = vsel %vm325, %v313, 0
    %v1080 = vsel %vm325, %v314, 0
    %v1083 = vsel %vm325, %v315, 0
    %v1086 = vsel %vm325, %v316, 0
    %v1089 = vsel %vm325, %v317, 0
    %v1092 = vsel %vm325, %v318, 0
    %vm1094 = vcmask 1041408
    %v1096 = vsel %vm1094, %v320, 0
    %1098 = vmatpush.msra.mxu0 0.0
    %1099 = vmatpush.msra.mxu0 0.0
    %1100 = vmatpush.msra.mxu0 0.0
    %1101 = vmatpush.msra.mxu0 0.0
    %1102 = vmatpush.msra.mxu0 0.0
    %1103 = vmatpush.msra.mxu0 0.0
    %1104 = vmatpush.msra.mxu0 0.0
    %1105 = vmatpush.msra.mxu0 0.0
    %1106 = vmatpush.msra.mxu0 0.0
    %1107 = vmatpush.msra.mxu0 0.0
    %1108 = vmatpush.msra.mxu0 0.0
    %1109 = vmatpush.msra.mxu0 0.0
    %1110 = vmatpush.msra.mxu0 0.0
    %1111 = vmatpush.msra.mxu0 0.0
    %1112 = vmatpush.msra.mxu0 %v1096
    %1113 = vmatpush.msra.mxu0 %v319
    %1114 = vmatmul.f32.gmra.mxu0 %v327
    %v1115 = vpop.f32.mrf.mxu0
    %v1116 = vadd.f32 %v323, %v1115
    %1117 = vmatmul.f32.gmra.mxu0 %v330
    %v1118 = vpop.f32.mrf.mxu0
    %v1119 = vadd.f32 %v323, %v1118
    %1120 = vmatmul.f32.gmra.mxu0 %v333
    %v1121 = vpop.f32.mrf.mxu0
    %v1122 = vadd.f32 %v323, %v1121
    %1123 = vmatmul.f32.gmra.mxu0 %v336
    %v1124 = vpop.f32.mrf.mxu0
    %v1125 = vadd.f32 %v323, %v1124
    %1126 = vmatmul.f32.gmra.mxu0 %v339
    %v1127 = vpop.f32.mrf.mxu0
    %v1128 = vadd.f32 %v323, %v1127
    %1129 = vmatmul.f32.gmra.mxu0 %v342
    %v1130 = vpop.f32.mrf.mxu0
    %v1131 = vadd.f32 %v323, %v1130
    %1132 = vmatmul.f32.gmra.mxu0 %v345
    %v1133 = vpop.f32.mrf.mxu0
    %v1134 = vadd.f32 %v323, %v1133
    %1135 = vmatmul.f32.gmra.mxu0 %v348
    %v1136 = vpop.f32.mrf.mxu0
    %v1137 = vadd.f32 %v323, %v1136
    %1138 = vmatmul.f32.gmra.mxu0 %v351
    %v1139 = vpop.f32.mrf.mxu0
    %v1140 = vadd.f32 %v323, %v1139
    %1141 = vmatmul.f32.gmra.mxu0 %v354
    %v1142 = vpop.f32.mrf.mxu0
    %v1143 = vadd.f32 %v323, %v1142
    %1144 = vmatmul.f32.gmra.mxu0 %v357
    %v1145 = vpop.f32.mrf.mxu0
    %v1146 = vadd.f32 %v323, %v1145
    %1147 = vmatmul.f32.gmra.mxu0 %v360
    %v1148 = vpop.f32.mrf.mxu0
    %v1149 = vadd.f32 %v323, %v1148
    %1150 = vmatmul.f32.gmra.mxu0 %v363
    %v1151 = vpop.f32.mrf.mxu0
    %v1152 = vadd.f32 %v323, %v1151
    %1153 = vmatmul.f32.gmra.mxu0 %v366
    %v1154 = vpop.f32.mrf.mxu0
    %v1155 = vadd.f32 %v323, %v1154
    %1156 = vmatmul.f32.gmra.mxu0 %v369
    %v1157 = vpop.f32.mrf.mxu0
    %v1158 = vadd.f32 %v323, %v1157
    %1159 = vmatmul.f32.gmra.mxu0 %v372
    %v1160 = vpop.f32.mrf.mxu0
    %v1161 = vadd.f32 %v323, %v1160
    %1162 = vmatmul.f32.gmra.mxu0 %v375
    %v1163 = vpop.f32.mrf.mxu0
    %v1164 = vadd.f32 %v323, %v1163
    %1165 = vmatmul.f32.gmra.mxu0 %v378
    %v1166 = vpop.f32.mrf.mxu0
    %v1167 = vadd.f32 %v323, %v1166
    %1168 = vmatmul.f32.gmra.mxu0 %v381
    %v1169 = vpop.f32.mrf.mxu0
    %v1170 = vadd.f32 %v323, %v1169
    %1171 = vmatmul.f32.gmra.mxu0 %v384
    %v1172 = vpop.f32.mrf.mxu0
    %v1173 = vadd.f32 %v323, %v1172
    %1174 = vmatmul.f32.gmra.mxu0 %v387
    %v1175 = vpop.f32.mrf.mxu0
    %v1176 = vadd.f32 %v323, %v1175
    %1177 = vmatmul.f32.gmra.mxu0 %v390
    %v1178 = vpop.f32.mrf.mxu0
    %v1179 = vadd.f32 %v323, %v1178
    %1180 = vmatmul.f32.gmra.mxu0 %v393
    %v1181 = vpop.f32.mrf.mxu0
    %v1182 = vadd.f32 %v323, %v1181
    %1183 = vmatmul.f32.gmra.mxu0 %v396
    %v1184 = vpop.f32.mrf.mxu0
    %v1185 = vadd.f32 %v323, %v1184
    %1186 = vmatmul.f32.gmra.mxu0 %v399
    %v1187 = vpop.f32.mrf.mxu0
    %v1188 = vadd.f32 %v323, %v1187
    %1189 = vmatmul.f32.gmra.mxu0 %v402
    %v1190 = vpop.f32.mrf.mxu0
    %v1191 = vadd.f32 %v323, %v1190
    %1192 = vmatmul.f32.gmra.mxu0 %v405
    %v1193 = vpop.f32.mrf.mxu0
    %v1194 = vadd.f32 %v323, %v1193
    %1195 = vmatmul.f32.gmra.mxu0 %v408
    %v1196 = vpop.f32.mrf.mxu0
    %v1197 = vadd.f32 %v323, %v1196
    %1198 = vmatmul.f32.gmra.mxu0 %v411
    %v1199 = vpop.f32.mrf.mxu0
    %v1200 = vadd.f32 %v323, %v1199
    %1201 = vmatmul.f32.gmra.mxu0 %v414
    %v1202 = vpop.f32.mrf.mxu0
    %v1203 = vadd.f32 %v323, %v1202
    %1204 = vmatmul.f32.gmra.mxu0 %v417
    %v1205 = vpop.f32.mrf.mxu0
    %v1206 = vadd.f32 %v323, %v1205
    %1207 = vmatmul.f32.gmra.mxu0 %v420
    %v1208 = vpop.f32.mrf.mxu0
    %v1209 = vadd.f32 %v323, %v1208
    %1210 = vmatmul.f32.gmra.mxu0 %v423
    %v1211 = vpop.f32.mrf.mxu0
    %v1212 = vadd.f32 %v323, %v1211
    %1213 = vmatmul.f32.gmra.mxu0 %v426
    %v1214 = vpop.f32.mrf.mxu0
    %v1215 = vadd.f32 %v323, %v1214
    %1216 = vmatmul.f32.gmra.mxu0 %v429
    %v1217 = vpop.f32.mrf.mxu0
    %v1218 = vadd.f32 %v323, %v1217
    %1219 = vmatmul.f32.gmra.mxu0 %v432
    %v1220 = vpop.f32.mrf.mxu0
    %v1221 = vadd.f32 %v323, %v1220
    %1222 = vmatmul.f32.gmra.mxu0 %v435
    %v1223 = vpop.f32.mrf.mxu0
    %v1224 = vadd.f32 %v323, %v1223
    %1225 = vmatmul.f32.gmra.mxu0 %v438
    %v1226 = vpop.f32.mrf.mxu0
    %v1227 = vadd.f32 %v323, %v1226
    %1228 = vmatmul.f32.gmra.mxu0 %v441
    %v1229 = vpop.f32.mrf.mxu0
    %v1230 = vadd.f32 %v323, %v1229
    %1231 = vmatmul.f32.gmra.mxu0 %v444
    %v1232 = vpop.f32.mrf.mxu0
    %v1233 = vadd.f32 %v323, %v1232
    %1234 = vmatmul.f32.gmra.mxu0 %v447
    %v1235 = vpop.f32.mrf.mxu0
    %v1236 = vadd.f32 %v323, %v1235
    %1237 = vmatmul.f32.gmra.mxu0 %v450
    %v1238 = vpop.f32.mrf.mxu0
    %v1239 = vadd.f32 %v323, %v1238
    %1240 = vmatmul.f32.gmra.mxu0 %v453
    %v1241 = vpop.f32.mrf.mxu0
    %v1242 = vadd.f32 %v323, %v1241
    %1243 = vmatmul.f32.gmra.mxu0 %v456
    %v1244 = vpop.f32.mrf.mxu0
    %v1245 = vadd.f32 %v323, %v1244
    %1246 = vmatmul.f32.gmra.mxu0 %v459
    %v1247 = vpop.f32.mrf.mxu0
    %v1248 = vadd.f32 %v323, %v1247
    %1249 = vmatmul.f32.gmra.mxu0 %v462
    %v1250 = vpop.f32.mrf.mxu0
    %v1251 = vadd.f32 %v323, %v1250
    %1252 = vmatmul.f32.gmra.mxu0 %v465
    %v1253 = vpop.f32.mrf.mxu0
    %v1254 = vadd.f32 %v323, %v1253
    %1255 = vmatmul.f32.gmra.mxu0 %v468
    %v1256 = vpop.f32.mrf.mxu0
    %v1257 = vadd.f32 %v323, %v1256
    %1258 = vmatmul.f32.gmra.mxu0 %v471
    %v1259 = vpop.f32.mrf.mxu0
    %v1260 = vadd.f32 %v323, %v1259
    %1261 = vmatmul.f32.gmra.mxu0 %v474
    %v1262 = vpop.f32.mrf.mxu0
    %v1263 = vadd.f32 %v323, %v1262
    %1264 = vmatmul.f32.gmra.mxu0 %v477
    %v1265 = vpop.f32.mrf.mxu0
    %v1266 = vadd.f32 %v323, %v1265
    %1267 = vmatmul.f32.gmra.mxu0 %v480
    %v1268 = vpop.f32.mrf.mxu0
    %v1269 = vadd.f32 %v323, %v1268
    %1270 = vmatmul.f32.gmra.mxu0 %v483
    %v1271 = vpop.f32.mrf.mxu0
    %v1272 = vadd.f32 %v323, %v1271
    %1273 = vmatmul.f32.gmra.mxu0 %v486
    %v1274 = vpop.f32.mrf.mxu0
    %v1275 = vadd.f32 %v323, %v1274
    %1276 = vmatmul.f32.gmra.mxu0 %v489
    %v1277 = vpop.f32.mrf.mxu0
    %v1278 = vadd.f32 %v323, %v1277
    %1279 = vmatmul.f32.gmra.mxu0 %v492
    %v1280 = vpop.f32.mrf.mxu0
    %v1281 = vadd.f32 %v323, %v1280
    %1282 = vmatmul.f32.gmra.mxu0 %v495
    %v1283 = vpop.f32.mrf.mxu0
    %v1284 = vadd.f32 %v323, %v1283
    %1285 = vmatmul.f32.gmra.mxu0 %v498
    %v1286 = vpop.f32.mrf.mxu0
    %v1287 = vadd.f32 %v323, %v1286
    %1288 = vmatmul.f32.gmra.mxu0 %v501
    %v1289 = vpop.f32.mrf.mxu0
    %v1290 = vadd.f32 %v323, %v1289
    %1291 = vmatmul.f32.gmra.mxu0 %v504
    %v1292 = vpop.f32.mrf.mxu0
    %v1293 = vadd.f32 %v323, %v1292
    %1294 = vmatmul.f32.gmra.mxu0 %v507
    %v1295 = vpop.f32.mrf.mxu0
    %v1296 = vadd.f32 %v323, %v1295
    %1297 = vmatmul.f32.gmra.mxu0 %v510
    %v1298 = vpop.f32.mrf.mxu0
    %v1299 = vadd.f32 %v323, %v1298
    %1300 = vmatmul.f32.gmra.mxu0 %v513
    %v1301 = vpop.f32.mrf.mxu0
    %v1302 = vadd.f32 %v323, %v1301
    %1303 = vmatmul.f32.gmra.mxu0 %v516
    %v1304 = vpop.f32.mrf.mxu0
    %v1305 = vadd.f32 %v323, %v1304
    %1306 = vmatmul.f32.gmra.mxu0 %v519
    %v1307 = vpop.f32.mrf.mxu0
    %v1308 = vadd.f32 %v323, %v1307
    %1309 = vmatmul.f32.gmra.mxu0 %v522
    %v1310 = vpop.f32.mrf.mxu0
    %v1311 = vadd.f32 %v323, %v1310
    %1312 = vmatmul.f32.gmra.mxu0 %v525
    %v1313 = vpop.f32.mrf.mxu0
    %v1314 = vadd.f32 %v323, %v1313
    %1315 = vmatmul.f32.gmra.mxu0 %v528
    %v1316 = vpop.f32.mrf.mxu0
    %v1317 = vadd.f32 %v323, %v1316
    %1318 = vmatmul.f32.gmra.mxu0 %v531
    %v1319 = vpop.f32.mrf.mxu0
    %v1320 = vadd.f32 %v323, %v1319
    %1321 = vmatmul.f32.gmra.mxu0 %v534
    %v1322 = vpop.f32.mrf.mxu0
    %v1323 = vadd.f32 %v323, %v1322
    %1324 = vmatmul.f32.gmra.mxu0 %v537
    %v1325 = vpop.f32.mrf.mxu0
    %v1326 = vadd.f32 %v323, %v1325
    %1327 = vmatmul.f32.gmra.mxu0 %v540
    %v1328 = vpop.f32.mrf.mxu0
    %v1329 = vadd.f32 %v323, %v1328
    %1330 = vmatmul.f32.gmra.mxu0 %v543
    %v1331 = vpop.f32.mrf.mxu0
    %v1332 = vadd.f32 %v323, %v1331
    %1333 = vmatmul.f32.gmra.mxu0 %v546
    %v1334 = vpop.f32.mrf.mxu0
    %v1335 = vadd.f32 %v323, %v1334
    %1336 = vmatmul.f32.gmra.mxu0 %v549
    %v1337 = vpop.f32.mrf.mxu0
    %v1338 = vadd.f32 %v323, %v1337
    %1339 = vmatmul.f32.gmra.mxu0 %v552
    %v1340 = vpop.f32.mrf.mxu0
    %v1341 = vadd.f32 %v323, %v1340
    %1342 = vmatmul.f32.gmra.mxu0 %v555
    %v1343 = vpop.f32.mrf.mxu0
    %v1344 = vadd.f32 %v323, %v1343
    %1345 = vmatmul.f32.gmra.mxu0 %v558
    %v1346 = vpop.f32.mrf.mxu0
    %v1347 = vadd.f32 %v323, %v1346
    %1348 = vmatmul.f32.gmra.mxu0 %v561
    %v1349 = vpop.f32.mrf.mxu0
    %v1350 = vadd.f32 %v323, %v1349
    %1351 = vmatmul.f32.gmra.mxu0 %v564
    %v1352 = vpop.f32.mrf.mxu0
    %v1353 = vadd.f32 %v323, %v1352
    %1354 = vmatmul.f32.gmra.mxu0 %v567
    %v1355 = vpop.f32.mrf.mxu0
    %v1356 = vadd.f32 %v323, %v1355
    %1357 = vmatmul.f32.gmra.mxu0 %v570
    %v1358 = vpop.f32.mrf.mxu0
    %v1359 = vadd.f32 %v323, %v1358
    %1360 = vmatmul.f32.gmra.mxu0 %v573
    %v1361 = vpop.f32.mrf.mxu0
    %v1362 = vadd.f32 %v323, %v1361
    %1363 = vmatmul.f32.gmra.mxu0 %v576
    %v1364 = vpop.f32.mrf.mxu0
    %v1365 = vadd.f32 %v323, %v1364
    %1366 = vmatmul.f32.gmra.mxu0 %v579
    %v1367 = vpop.f32.mrf.mxu0
    %v1368 = vadd.f32 %v323, %v1367
    %1369 = vmatmul.f32.gmra.mxu0 %v582
    %v1370 = vpop.f32.mrf.mxu0
    %v1371 = vadd.f32 %v323, %v1370
    %1372 = vmatmul.f32.gmra.mxu0 %v585
    %v1373 = vpop.f32.mrf.mxu0
    %v1374 = vadd.f32 %v323, %v1373
    %1375 = vmatmul.f32.gmra.mxu0 %v588
    %v1376 = vpop.f32.mrf.mxu0
    %v1377 = vadd.f32 %v323, %v1376
    %1378 = vmatmul.f32.gmra.mxu0 %v591
    %v1379 = vpop.f32.mrf.mxu0
    %v1380 = vadd.f32 %v323, %v1379
    %1381 = vmatmul.f32.gmra.mxu0 %v594
    %v1382 = vpop.f32.mrf.mxu0
    %v1383 = vadd.f32 %v323, %v1382
    %1384 = vmatmul.f32.gmra.mxu0 %v597
    %v1385 = vpop.f32.mrf.mxu0
    %v1386 = vadd.f32 %v323, %v1385
    %1387 = vmatmul.f32.gmra.mxu0 %v600
    %v1388 = vpop.f32.mrf.mxu0
    %v1389 = vadd.f32 %v323, %v1388
    %1390 = vmatmul.f32.gmra.mxu0 %v603
    %v1391 = vpop.f32.mrf.mxu0
    %v1392 = vadd.f32 %v323, %v1391
    %1393 = vmatmul.f32.gmra.mxu0 %v606
    %v1394 = vpop.f32.mrf.mxu0
    %v1395 = vadd.f32 %v323, %v1394
    %1396 = vmatmul.f32.gmra.mxu0 %v609
    %v1397 = vpop.f32.mrf.mxu0
    %v1398 = vadd.f32 %v323, %v1397
    %1399 = vmatmul.f32.gmra.mxu0 %v612
    %v1400 = vpop.f32.mrf.mxu0
    %v1401 = vadd.f32 %v323, %v1400
    %1402 = vmatmul.f32.gmra.mxu0 %v615
    %v1403 = vpop.f32.mrf.mxu0
    %v1404 = vadd.f32 %v323, %v1403
    %1405 = vmatmul.f32.gmra.mxu0 %v618
    %v1406 = vpop.f32.mrf.mxu0
    %v1407 = vadd.f32 %v323, %v1406
    %1408 = vmatmul.f32.gmra.mxu0 %v621
    %v1409 = vpop.f32.mrf.mxu0
    %v1410 = vadd.f32 %v323, %v1409
    %1411 = vmatmul.f32.gmra.mxu0 %v624
    %v1412 = vpop.f32.mrf.mxu0
    %v1413 = vadd.f32 %v323, %v1412
    %1414 = vmatmul.f32.gmra.mxu0 %v627
    %v1415 = vpop.f32.mrf.mxu0
    %v1416 = vadd.f32 %v323, %v1415
    %1417 = vmatmul.f32.gmra.mxu0 %v630
    %v1418 = vpop.f32.mrf.mxu0
    %v1419 = vadd.f32 %v323, %v1418
    %1420 = vmatmul.f32.gmra.mxu0 %v633
    %v1421 = vpop.f32.mrf.mxu0
    %v1422 = vadd.f32 %v323, %v1421
    %1423 = vmatmul.f32.gmra.mxu0 %v636
    %v1424 = vpop.f32.mrf.mxu0
    %v1425 = vadd.f32 %v323, %v1424
    %1426 = vmatmul.f32.gmra.mxu0 %v639
    %v1427 = vpop.f32.mrf.mxu0
    %v1428 = vadd.f32 %v323, %v1427
    %1429 = vmatmul.f32.gmra.mxu0 %v642
    %v1430 = vpop.f32.mrf.mxu0
    %v1431 = vadd.f32 %v323, %v1430
    %1432 = vmatmul.f32.gmra.mxu0 %v645
    %v1433 = vpop.f32.mrf.mxu0
    %v1434 = vadd.f32 %v323, %v1433
    %1435 = vmatmul.f32.gmra.mxu0 %v648
    %v1436 = vpop.f32.mrf.mxu0
    %v1437 = vadd.f32 %v323, %v1436
    %1438 = vmatmul.f32.gmra.mxu0 %v651
    %v1439 = vpop.f32.mrf.mxu0
    %v1440 = vadd.f32 %v323, %v1439
    %1441 = vmatmul.f32.gmra.mxu0 %v654
    %v1442 = vpop.f32.mrf.mxu0
    %v1443 = vadd.f32 %v323, %v1442
    %1444 = vmatmul.f32.gmra.mxu0 %v657
    %v1445 = vpop.f32.mrf.mxu0
    %v1446 = vadd.f32 %v323, %v1445
    %1447 = vmatmul.f32.gmra.mxu0 %v660
    %v1448 = vpop.f32.mrf.mxu0
    %v1449 = vadd.f32 %v323, %v1448
    %1450 = vmatmul.f32.gmra.mxu0 %v663
    %v1451 = vpop.f32.mrf.mxu0
    %v1452 = vadd.f32 %v323, %v1451
    %1453 = vmatmul.f32.gmra.mxu0 %v666
    %v1454 = vpop.f32.mrf.mxu0
    %v1455 = vadd.f32 %v323, %v1454
    %1456 = vmatmul.f32.gmra.mxu0 %v669
    %v1457 = vpop.f32.mrf.mxu0
    %v1458 = vadd.f32 %v323, %v1457
    %1459 = vmatmul.f32.gmra.mxu0 %v672
    %v1460 = vpop.f32.mrf.mxu0
    %v1461 = vadd.f32 %v323, %v1460
    %1462 = vmatmul.f32.gmra.mxu0 %v675
    %v1463 = vpop.f32.mrf.mxu0
    %v1464 = vadd.f32 %v323, %v1463
    %1465 = vmatmul.f32.gmra.mxu0 %v678
    %v1466 = vpop.f32.mrf.mxu0
    %v1467 = vadd.f32 %v323, %v1466
    %1468 = vmatmul.f32.gmra.mxu0 %v681
    %v1469 = vpop.f32.mrf.mxu0
    %v1470 = vadd.f32 %v323, %v1469
    %1471 = vmatmul.f32.gmra.mxu0 %v684
    %v1472 = vpop.f32.mrf.mxu0
    %v1473 = vadd.f32 %v323, %v1472
    %1474 = vmatmul.f32.gmra.mxu0 %v687
    %v1475 = vpop.f32.mrf.mxu0
    %v1476 = vadd.f32 %v323, %v1475
    %1477 = vmatmul.f32.gmra.mxu0 %v690
    %v1478 = vpop.f32.mrf.mxu0
    %v1479 = vadd.f32 %v323, %v1478
    %1480 = vmatmul.f32.gmra.mxu0 %v693
    %v1481 = vpop.f32.mrf.mxu0
    %v1482 = vadd.f32 %v323, %v1481
    %1483 = vmatmul.f32.gmra.mxu0 %v696
    %v1484 = vpop.f32.mrf.mxu0
    %v1485 = vadd.f32 %v323, %v1484
    %1486 = vmatmul.f32.gmra.mxu0 %v699
    %v1487 = vpop.f32.mrf.mxu0
    %v1488 = vadd.f32 %v323, %v1487
    %1489 = vmatmul.f32.gmra.mxu0 %v702
    %v1490 = vpop.f32.mrf.mxu0
    %v1491 = vadd.f32 %v323, %v1490
    %1492 = vmatmul.f32.gmra.mxu0 %v705
    %v1493 = vpop.f32.mrf.mxu0
    %v1494 = vadd.f32 %v323, %v1493
    %1495 = vmatmul.f32.gmra.mxu0 %v708
    %v1496 = vpop.f32.mrf.mxu0
    %v1497 = vadd.f32 %v323, %v1496
    %1498 = vmatmul.f32.gmra.mxu0 %v711
    %v1499 = vpop.f32.mrf.mxu0
    %v1500 = vadd.f32 %v323, %v1499
    %1501 = vmatmul.f32.gmra.mxu0 %v714
    %v1502 = vpop.f32.mrf.mxu0
    %v1503 = vadd.f32 %v323, %v1502
    %1504 = vmatmul.f32.gmra.mxu0 %v717
    %v1505 = vpop.f32.mrf.mxu0
    %v1506 = vadd.f32 %v323, %v1505
    %1507 = vmatmul.f32.gmra.mxu0 %v720
    %v1508 = vpop.f32.mrf.mxu0
    %v1509 = vadd.f32 %v323, %v1508
    %1510 = vmatmul.f32.gmra.mxu0 %v723
    %v1511 = vpop.f32.mrf.mxu0
    %v1512 = vadd.f32 %v323, %v1511
    %1513 = vmatmul.f32.gmra.mxu0 %v726
    %v1514 = vpop.f32.mrf.mxu0
    %v1515 = vadd.f32 %v323, %v1514
    %1516 = vmatmul.f32.gmra.mxu0 %v729
    %v1517 = vpop.f32.mrf.mxu0
    %v1518 = vadd.f32 %v323, %v1517
    %1519 = vmatmul.f32.gmra.mxu0 %v732
    %v1520 = vpop.f32.mrf.mxu0
    %v1521 = vadd.f32 %v323, %v1520
    %1522 = vmatmul.f32.gmra.mxu0 %v735
    %v1523 = vpop.f32.mrf.mxu0
    %v1524 = vadd.f32 %v323, %v1523
    %1525 = vmatmul.f32.gmra.mxu0 %v738
    %v1526 = vpop.f32.mrf.mxu0
    %v1527 = vadd.f32 %v323, %v1526
    %1528 = vmatmul.f32.gmra.mxu0 %v741
    %v1529 = vpop.f32.mrf.mxu0
    %v1530 = vadd.f32 %v323, %v1529
    %1531 = vmatmul.f32.gmra.mxu0 %v744
    %v1532 = vpop.f32.mrf.mxu0
    %v1533 = vadd.f32 %v323, %v1532
    %1534 = vmatmul.f32.gmra.mxu0 %v747
    %v1535 = vpop.f32.mrf.mxu0
    %v1536 = vadd.f32 %v323, %v1535
    %1537 = vmatmul.f32.gmra.mxu0 %v750
    %v1538 = vpop.f32.mrf.mxu0
    %v1539 = vadd.f32 %v323, %v1538
    %1540 = vmatmul.f32.gmra.mxu0 %v753
    %v1541 = vpop.f32.mrf.mxu0
    %v1542 = vadd.f32 %v323, %v1541
    %1543 = vmatmul.f32.gmra.mxu0 %v756
    %v1544 = vpop.f32.mrf.mxu0
    %v1545 = vadd.f32 %v323, %v1544
    %1546 = vmatmul.f32.gmra.mxu0 %v759
    %v1547 = vpop.f32.mrf.mxu0
    %v1548 = vadd.f32 %v323, %v1547
    %1549 = vmatmul.f32.gmra.mxu0 %v762
    %v1550 = vpop.f32.mrf.mxu0
    %v1551 = vadd.f32 %v323, %v1550
    %1552 = vmatmul.f32.gmra.mxu0 %v765
    %v1553 = vpop.f32.mrf.mxu0
    %v1554 = vadd.f32 %v323, %v1553
    %1555 = vmatmul.f32.gmra.mxu0 %v768
    %v1556 = vpop.f32.mrf.mxu0
    %v1557 = vadd.f32 %v323, %v1556
    %1558 = vmatmul.f32.gmra.mxu0 %v771
    %v1559 = vpop.f32.mrf.mxu0
    %v1560 = vadd.f32 %v323, %v1559
    %1561 = vmatmul.f32.gmra.mxu0 %v774
    %v1562 = vpop.f32.mrf.mxu0
    %v1563 = vadd.f32 %v323, %v1562
    %1564 = vmatmul.f32.gmra.mxu0 %v777
    %v1565 = vpop.f32.mrf.mxu0
    %v1566 = vadd.f32 %v323, %v1565
    %1567 = vmatmul.f32.gmra.mxu0 %v780
    %v1568 = vpop.f32.mrf.mxu0
    %v1569 = vadd.f32 %v323, %v1568
    %1570 = vmatmul.f32.gmra.mxu0 %v783
    %v1571 = vpop.f32.mrf.mxu0
    %v1572 = vadd.f32 %v323, %v1571
    %1573 = vmatmul.f32.gmra.mxu0 %v786
    %v1574 = vpop.f32.mrf.mxu0
    %v1575 = vadd.f32 %v323, %v1574
    %1576 = vmatmul.f32.gmra.mxu0 %v789
    %v1577 = vpop.f32.mrf.mxu0
    %v1578 = vadd.f32 %v323, %v1577
    %1579 = vmatmul.f32.gmra.mxu0 %v792
    %v1580 = vpop.f32.mrf.mxu0
    %v1581 = vadd.f32 %v323, %v1580
    %1582 = vmatmul.f32.gmra.mxu0 %v795
    %v1583 = vpop.f32.mrf.mxu0
    %v1584 = vadd.f32 %v323, %v1583
    %1585 = vmatmul.f32.gmra.mxu0 %v798
    %v1586 = vpop.f32.mrf.mxu0
    %v1587 = vadd.f32 %v323, %v1586
    %1588 = vmatmul.f32.gmra.mxu0 %v801
    %v1589 = vpop.f32.mrf.mxu0
    %v1590 = vadd.f32 %v323, %v1589
    %1591 = vmatmul.f32.gmra.mxu0 %v804
    %v1592 = vpop.f32.mrf.mxu0
    %v1593 = vadd.f32 %v323, %v1592
    %1594 = vmatmul.f32.gmra.mxu0 %v807
    %v1595 = vpop.f32.mrf.mxu0
    %v1596 = vadd.f32 %v323, %v1595
    %1597 = vmatmul.f32.gmra.mxu0 %v810
    %v1598 = vpop.f32.mrf.mxu0
    %v1599 = vadd.f32 %v323, %v1598
    %1600 = vmatmul.f32.gmra.mxu0 %v813
    %v1601 = vpop.f32.mrf.mxu0
    %v1602 = vadd.f32 %v323, %v1601
    %1603 = vmatmul.f32.gmra.mxu0 %v816
    %v1604 = vpop.f32.mrf.mxu0
    %v1605 = vadd.f32 %v323, %v1604
    %1606 = vmatmul.f32.gmra.mxu0 %v819
    %v1607 = vpop.f32.mrf.mxu0
    %v1608 = vadd.f32 %v323, %v1607
    %1609 = vmatmul.f32.gmra.mxu0 %v822
    %v1610 = vpop.f32.mrf.mxu0
    %v1611 = vadd.f32 %v323, %v1610
    %1612 = vmatmul.f32.gmra.mxu0 %v825
    %v1613 = vpop.f32.mrf.mxu0
    %v1614 = vadd.f32 %v323, %v1613
    %1615 = vmatmul.f32.gmra.mxu0 %v828
    %v1616 = vpop.f32.mrf.mxu0
    %v1617 = vadd.f32 %v323, %v1616
    %1618 = vmatmul.f32.gmra.mxu0 %v831
    %v1619 = vpop.f32.mrf.mxu0
    %v1620 = vadd.f32 %v323, %v1619
    %1621 = vmatmul.f32.gmra.mxu0 %v834
    %v1622 = vpop.f32.mrf.mxu0
    %v1623 = vadd.f32 %v323, %v1622
    %1624 = vmatmul.f32.gmra.mxu0 %v837
    %v1625 = vpop.f32.mrf.mxu0
    %v1626 = vadd.f32 %v323, %v1625
    %1627 = vmatmul.f32.gmra.mxu0 %v840
    %v1628 = vpop.f32.mrf.mxu0
    %v1629 = vadd.f32 %v323, %v1628
    %1630 = vmatmul.f32.gmra.mxu0 %v843
    %v1631 = vpop.f32.mrf.mxu0
    %v1632 = vadd.f32 %v323, %v1631
    %1633 = vmatmul.f32.gmra.mxu0 %v846
    %v1634 = vpop.f32.mrf.mxu0
    %v1635 = vadd.f32 %v323, %v1634
    %1636 = vmatmul.f32.gmra.mxu0 %v849
    %v1637 = vpop.f32.mrf.mxu0
    %v1638 = vadd.f32 %v323, %v1637
    %1639 = vmatmul.f32.gmra.mxu0 %v852
    %v1640 = vpop.f32.mrf.mxu0
    %v1641 = vadd.f32 %v323, %v1640
    %1642 = vmatmul.f32.gmra.mxu0 %v855
    %v1643 = vpop.f32.mrf.mxu0
    %v1644 = vadd.f32 %v323, %v1643
    %1645 = vmatmul.f32.gmra.mxu0 %v858
    %v1646 = vpop.f32.mrf.mxu0
    %v1647 = vadd.f32 %v323, %v1646
    %1648 = vmatmul.f32.gmra.mxu0 %v861
    %v1649 = vpop.f32.mrf.mxu0
    %v1650 = vadd.f32 %v323, %v1649
    %1651 = vmatmul.f32.gmra.mxu0 %v864
    %v1652 = vpop.f32.mrf.mxu0
    %v1653 = vadd.f32 %v323, %v1652
    %1654 = vmatmul.f32.gmra.mxu0 %v867
    %v1655 = vpop.f32.mrf.mxu0
    %v1656 = vadd.f32 %v323, %v1655
    %1657 = vmatmul.f32.gmra.mxu0 %v870
    %v1658 = vpop.f32.mrf.mxu0
    %v1659 = vadd.f32 %v323, %v1658
    %1660 = vmatmul.f32.gmra.mxu0 %v873
    %v1661 = vpop.f32.mrf.mxu0
    %v1662 = vadd.f32 %v323, %v1661
    %1663 = vmatmul.f32.gmra.mxu0 %v876
    %v1664 = vpop.f32.mrf.mxu0
    %v1665 = vadd.f32 %v323, %v1664
    %1666 = vmatmul.f32.gmra.mxu0 %v879
    %v1667 = vpop.f32.mrf.mxu0
    %v1668 = vadd.f32 %v323, %v1667
    %1669 = vmatmul.f32.gmra.mxu0 %v882
    %v1670 = vpop.f32.mrf.mxu0
    %v1671 = vadd.f32 %v323, %v1670
    %1672 = vmatmul.f32.gmra.mxu0 %v885
    %v1673 = vpop.f32.mrf.mxu0
    %v1674 = vadd.f32 %v323, %v1673
    %1675 = vmatmul.f32.gmra.mxu0 %v888
    %v1676 = vpop.f32.mrf.mxu0
    %v1677 = vadd.f32 %v323, %v1676
    %1678 = vmatmul.f32.gmra.mxu0 %v891
    %v1679 = vpop.f32.mrf.mxu0
    %v1680 = vadd.f32 %v323, %v1679
    %1681 = vmatmul.f32.gmra.mxu0 %v894
    %v1682 = vpop.f32.mrf.mxu0
    %v1683 = vadd.f32 %v323, %v1682
    %1684 = vmatmul.f32.gmra.mxu0 %v897
    %v1685 = vpop.f32.mrf.mxu0
    %v1686 = vadd.f32 %v323, %v1685
    %1687 = vmatmul.f32.gmra.mxu0 %v900
    %v1688 = vpop.f32.mrf.mxu0
    %v1689 = vadd.f32 %v323, %v1688
    %1690 = vmatmul.f32.gmra.mxu0 %v903
    %v1691 = vpop.f32.mrf.mxu0
    %v1692 = vadd.f32 %v323, %v1691
    %1693 = vmatmul.f32.gmra.mxu0 %v906
    %v1694 = vpop.f32.mrf.mxu0
    %v1695 = vadd.f32 %v323, %v1694
    %1696 = vmatmul.f32.gmra.mxu0 %v909
    %v1697 = vpop.f32.mrf.mxu0
    %v1698 = vadd.f32 %v323, %v1697
    %1699 = vmatmul.f32.gmra.mxu0 %v912
    %v1700 = vpop.f32.mrf.mxu0
    %v1701 = vadd.f32 %v323, %v1700
    %1702 = vmatmul.f32.gmra.mxu0 %v915
    %v1703 = vpop.f32.mrf.mxu0
    %v1704 = vadd.f32 %v323, %v1703
    %1705 = vmatmul.f32.gmra.mxu0 %v918
    %v1706 = vpop.f32.mrf.mxu0
    %v1707 = vadd.f32 %v323, %v1706
    %1708 = vmatmul.f32.gmra.mxu0 %v921
    %v1709 = vpop.f32.mrf.mxu0
    %v1710 = vadd.f32 %v323, %v1709
    %1711 = vmatmul.f32.gmra.mxu0 %v924
    %v1712 = vpop.f32.mrf.mxu0
    %v1713 = vadd.f32 %v323, %v1712
    %1714 = vmatmul.f32.gmra.mxu0 %v927
    %v1715 = vpop.f32.mrf.mxu0
    %v1716 = vadd.f32 %v323, %v1715
    %1717 = vmatmul.f32.gmra.mxu0 %v930
    %v1718 = vpop.f32.mrf.mxu0
    %v1719 = vadd.f32 %v323, %v1718
    %1720 = vmatmul.f32.gmra.mxu0 %v933
    %v1721 = vpop.f32.mrf.mxu0
    %v1722 = vadd.f32 %v323, %v1721
    %1723 = vmatmul.f32.gmra.mxu0 %v936
    %v1724 = vpop.f32.mrf.mxu0
    %v1725 = vadd.f32 %v323, %v1724
    %1726 = vmatmul.f32.gmra.mxu0 %v939
    %v1727 = vpop.f32.mrf.mxu0
    %v1728 = vadd.f32 %v323, %v1727
    %1729 = vmatmul.f32.gmra.mxu0 %v942
    %v1730 = vpop.f32.mrf.mxu0
    %v1731 = vadd.f32 %v323, %v1730
    %1732 = vmatmul.f32.gmra.mxu0 %v945
    %v1733 = vpop.f32.mrf.mxu0
    %v1734 = vadd.f32 %v323, %v1733
    %1735 = vmatmul.f32.gmra.mxu0 %v948
    %v1736 = vpop.f32.mrf.mxu0
    %v1737 = vadd.f32 %v323, %v1736
    %1738 = vmatmul.f32.gmra.mxu0 %v951
    %v1739 = vpop.f32.mrf.mxu0
    %v1740 = vadd.f32 %v323, %v1739
    %1741 = vmatmul.f32.gmra.mxu0 %v954
    %v1742 = vpop.f32.mrf.mxu0
    %v1743 = vadd.f32 %v323, %v1742
    %1744 = vmatmul.f32.gmra.mxu0 %v957
    %v1745 = vpop.f32.mrf.mxu0
    %v1746 = vadd.f32 %v323, %v1745
    %1747 = vmatmul.f32.gmra.mxu0 %v960
    %v1748 = vpop.f32.mrf.mxu0
    %v1749 = vadd.f32 %v323, %v1748
    %1750 = vmatmul.f32.gmra.mxu0 %v963
    %v1751 = vpop.f32.mrf.mxu0
    %v1752 = vadd.f32 %v323, %v1751
    %1753 = vmatmul.f32.gmra.mxu0 %v966
    %v1754 = vpop.f32.mrf.mxu0
    %v1755 = vadd.f32 %v323, %v1754
    %1756 = vmatmul.f32.gmra.mxu0 %v969
    %v1757 = vpop.f32.mrf.mxu0
    %v1758 = vadd.f32 %v323, %v1757
    %1759 = vmatmul.f32.gmra.mxu0 %v972
    %v1760 = vpop.f32.mrf.mxu0
    %v1761 = vadd.f32 %v323, %v1760
    %1762 = vmatmul.f32.gmra.mxu0 %v975
    %v1763 = vpop.f32.mrf.mxu0
    %v1764 = vadd.f32 %v323, %v1763
    %1765 = vmatmul.f32.gmra.mxu0 %v978
    %v1766 = vpop.f32.mrf.mxu0
    %v1767 = vadd.f32 %v323, %v1766
    %1768 = vmatmul.f32.gmra.mxu0 %v981
    %v1769 = vpop.f32.mrf.mxu0
    %v1770 = vadd.f32 %v323, %v1769
    %1771 = vmatmul.f32.gmra.mxu0 %v984
    %v1772 = vpop.f32.mrf.mxu0
    %v1773 = vadd.f32 %v323, %v1772
    %1774 = vmatmul.f32.gmra.mxu0 %v987
    %v1775 = vpop.f32.mrf.mxu0
    %v1776 = vadd.f32 %v323, %v1775
    %1777 = vmatmul.f32.gmra.mxu0 %v990
    %v1778 = vpop.f32.mrf.mxu0
    %v1779 = vadd.f32 %v323, %v1778
    %1780 = vmatmul.f32.gmra.mxu0 %v993
    %v1781 = vpop.f32.mrf.mxu0
    %v1782 = vadd.f32 %v323, %v1781
    %1783 = vmatmul.f32.gmra.mxu0 %v996
    %v1784 = vpop.f32.mrf.mxu0
    %v1785 = vadd.f32 %v323, %v1784
    %1786 = vmatmul.f32.gmra.mxu0 %v999
    %v1787 = vpop.f32.mrf.mxu0
    %v1788 = vadd.f32 %v323, %v1787
    %1789 = vmatmul.f32.gmra.mxu0 %v1002
    %v1790 = vpop.f32.mrf.mxu0
    %v1791 = vadd.f32 %v323, %v1790
    %1792 = vmatmul.f32.gmra.mxu0 %v1005
    %v1793 = vpop.f32.mrf.mxu0
    %v1794 = vadd.f32 %v323, %v1793
    %1795 = vmatmul.f32.gmra.mxu0 %v1008
    %v1796 = vpop.f32.mrf.mxu0
    %v1797 = vadd.f32 %v323, %v1796
    %1798 = vmatmul.f32.gmra.mxu0 %v1011
    %v1799 = vpop.f32.mrf.mxu0
    %v1800 = vadd.f32 %v323, %v1799
    %1801 = vmatmul.f32.gmra.mxu0 %v1014
    %v1802 = vpop.f32.mrf.mxu0
    %v1803 = vadd.f32 %v323, %v1802
    %1804 = vmatmul.f32.gmra.mxu0 %v1017
    %v1805 = vpop.f32.mrf.mxu0
    %v1806 = vadd.f32 %v323, %v1805
    %1807 = vmatmul.f32.gmra.mxu0 %v1020
    %v1808 = vpop.f32.mrf.mxu0
    %v1809 = vadd.f32 %v323, %v1808
    %1810 = vmatmul.f32.gmra.mxu0 %v1023
    %v1811 = vpop.f32.mrf.mxu0
    %v1812 = vadd.f32 %v323, %v1811
    %1813 = vmatmul.f32.gmra.mxu0 %v1026
    %v1814 = vpop.f32.mrf.mxu0
    %v1815 = vadd.f32 %v323, %v1814
    %1816 = vmatmul.f32.gmra.mxu0 %v1029
    %v1817 = vpop.f32.mrf.mxu0
    %v1818 = vadd.f32 %v323, %v1817
    %1819 = vmatmul.f32.gmra.mxu0 %v1032
    %v1820 = vpop.f32.mrf.mxu0
    %v1821 = vadd.f32 %v323, %v1820
    %1822 = vmatmul.f32.gmra.mxu0 %v1035
    %v1823 = vpop.f32.mrf.mxu0
    %v1824 = vadd.f32 %v323, %v1823
    %1825 = vmatmul.f32.gmra.mxu0 %v1038
    %v1826 = vpop.f32.mrf.mxu0
    %v1827 = vadd.f32 %v323, %v1826
    %1828 = vmatmul.f32.gmra.mxu0 %v1041
    %v1829 = vpop.f32.mrf.mxu0
    %v1830 = vadd.f32 %v323, %v1829
    %1831 = vmatmul.f32.gmra.mxu0 %v1044
    %v1832 = vpop.f32.mrf.mxu0
    %v1833 = vadd.f32 %v323, %v1832
    %1834 = vmatmul.f32.gmra.mxu0 %v1047
    %v1835 = vpop.f32.mrf.mxu0
    %v1836 = vadd.f32 %v323, %v1835
    %1837 = vmatmul.f32.gmra.mxu0 %v1050
    %v1838 = vpop.f32.mrf.mxu0
    %v1839 = vadd.f32 %v323, %v1838
    %1840 = vmatmul.f32.gmra.mxu0 %v1053
    %v1841 = vpop.f32.mrf.mxu0
    %v1842 = vadd.f32 %v323, %v1841
    %1843 = vmatmul.f32.gmra.mxu0 %v1056
    %v1844 = vpop.f32.mrf.mxu0
    %v1845 = vadd.f32 %v323, %v1844
    %1846 = vmatmul.f32.gmra.mxu0 %v1059
    %v1847 = vpop.f32.mrf.mxu0
    %v1848 = vadd.f32 %v323, %v1847
    %1849 = vmatmul.f32.gmra.mxu0 %v1062
    %v1850 = vpop.f32.mrf.mxu0
    %v1851 = vadd.f32 %v323, %v1850
    %1852 = vmatmul.f32.gmra.mxu0 %v1065
    %v1853 = vpop.f32.mrf.mxu0
    %v1854 = vadd.f32 %v323, %v1853
    %1855 = vmatmul.f32.gmra.mxu0 %v1068
    %v1856 = vpop.f32.mrf.mxu0
    %v1857 = vadd.f32 %v323, %v1856
    %1858 = vmatmul.f32.gmra.mxu0 %v1071
    %v1859 = vpop.f32.mrf.mxu0
    %v1860 = vadd.f32 %v323, %v1859
    %1861 = vmatmul.f32.gmra.mxu0 %v1074
    %v1862 = vpop.f32.mrf.mxu0
    %v1863 = vadd.f32 %v323, %v1862
    %1864 = vmatmul.f32.gmra.mxu0 %v1077
    %v1865 = vpop.f32.mrf.mxu0
    %v1866 = vadd.f32 %v323, %v1865
    %1867 = vmatmul.f32.gmra.mxu0 %v1080
    %v1868 = vpop.f32.mrf.mxu0
    %v1869 = vadd.f32 %v323, %v1868
    %1870 = vmatmul.f32.gmra.mxu0 %v1083
    %v1871 = vpop.f32.mrf.mxu0
    %v1872 = vadd.f32 %v323, %v1871
    %1873 = vmatmul.f32.gmra.mxu0 %v1086
    %v1874 = vpop.f32.mrf.mxu0
    %v1875 = vadd.f32 %v323, %v1874
    %1876 = vmatmul.f32.gmra.mxu0 %v1089
    %v1877 = vpop.f32.mrf.mxu0
    %v1878 = vadd.f32 %v323, %v1877
    %1879 = vmatmul.f32.gmra.mxu0 %v1092
    %v1880 = vpop.f32.mrf.mxu0
    %v1881 = vadd.f32 %v323, %v1880
    %1882 = vdwg.mxu0
    %v1883 = vmax.f32 %v1116, 0.0
    %v1884 = vmax.f32 %v1119, 0.0
    %v1885 = vmax.f32 %v1122, 0.0
    %v1886 = vmax.f32 %v1125, 0.0
    %v1887 = vmax.f32 %v1128, 0.0
    %v1888 = vmax.f32 %v1131, 0.0
    %v1889 = vmax.f32 %v1134, 0.0
    %v1890 = vmax.f32 %v1137, 0.0
    %v1891 = vmax.f32 %v1140, 0.0
    %v1892 = vmax.f32 %v1143, 0.0
    %v1893 = vmax.f32 %v1146, 0.0
    %v1894 = vmax.f32 %v1149, 0.0
    %v1895 = vmax.f32 %v1152, 0.0
    %v1896 = vmax.f32 %v1155, 0.0
    %v1897 = vmax.f32 %v1158, 0.0
    %v1898 = vmax.f32 %v1161, 0.0
    %v1899 = vmax.f32 %v1164, 0.0
    %v1900 = vmax.f32 %v1167, 0.0
    %v1901 = vmax.f32 %v1170, 0.0
    %v1902 = vmax.f32 %v1173, 0.0
    %v1903 = vmax.f32 %v1176, 0.0
    %v1904 = vmax.f32 %v1179, 0.0
    %v1905 = vmax.f32 %v1182, 0.0
    %v1906 = vmax.f32 %v1185, 0.0
    %v1907 = vmax.f32 %v1188, 0.0
    %v1908 = vmax.f32 %v1191, 0.0
    %v1909 = vmax.f32 %v1194, 0.0
    %v1910 = vmax.f32 %v1197, 0.0
    %v1911 = vmax.f32 %v1200, 0.0
    %v1912 = vmax.f32 %v1203, 0.0
    %v1913 = vmax.f32 %v1206, 0.0
    %v1914 = vmax.f32 %v1209, 0.0
    %v1915 = vmax.f32 %v1212, 0.0
    %v1916 = vmax.f32 %v1215, 0.0
    %v1917 = vmax.f32 %v1218, 0.0
    %v1918 = vmax.f32 %v1221, 0.0
    %v1919 = vmax.f32 %v1224, 0.0
    %v1920 = vmax.f32 %v1227, 0.0
    %v1921 = vmax.f32 %v1230, 0.0
    %v1922 = vmax.f32 %v1233, 0.0
    %v1923 = vmax.f32 %v1236, 0.0
    %v1924 = vmax.f32 %v1239, 0.0
    %v1925 = vmax.f32 %v1242, 0.0
    %v1926 = vmax.f32 %v1245, 0.0
    %v1927 = vmax.f32 %v1248, 0.0
    %v1928 = vmax.f32 %v1251, 0.0
    %v1929 = vmax.f32 %v1254, 0.0
    %v1930 = vmax.f32 %v1257, 0.0
    %v1931 = vmax.f32 %v1260, 0.0
    %v1932 = vmax.f32 %v1263, 0.0
    %v1933 = vmax.f32 %v1266, 0.0
    %v1934 = vmax.f32 %v1269, 0.0
    %v1935 = vmax.f32 %v1272, 0.0
    %v1936 = vmax.f32 %v1275, 0.0
    %v1937 = vmax.f32 %v1278, 0.0
    %v1938 = vmax.f32 %v1281, 0.0
    %v1939 = vmax.f32 %v1284, 0.0
    %v1940 = vmax.f32 %v1287, 0.0
    %v1941 = vmax.f32 %v1290, 0.0
    %v1942 = vmax.f32 %v1293, 0.0
    %v1943 = vmax.f32 %v1296, 0.0
    %v1944 = vmax.f32 %v1299, 0.0
    %v1945 = vmax.f32 %v1302, 0.0
    %v1946 = vmax.f32 %v1305, 0.0
    %v1947 = vmax.f32 %v1308, 0.0
    %v1948 = vmax.f32 %v1311, 0.0
    %v1949 = vmax.f32 %v1314, 0.0
    %v1950 = vmax.f32 %v1317, 0.0
    %v1951 = vmax.f32 %v1320, 0.0
    %v1952 = vmax.f32 %v1323, 0.0
    %v1953 = vmax.f32 %v1326, 0.0
    %v1954 = vmax.f32 %v1329, 0.0
    %v1955 = vmax.f32 %v1332, 0.0
    %v1956 = vmax.f32 %v1335, 0.0
    %v1957 = vmax.f32 %v1338, 0.0
    %v1958 = vmax.f32 %v1341, 0.0
    %v1959 = vmax.f32 %v1344, 0.0
    %v1960 = vmax.f32 %v1347, 0.0
    %v1961 = vmax.f32 %v1350, 0.0
    %v1962 = vmax.f32 %v1353, 0.0
    %v1963 = vmax.f32 %v1356, 0.0
    %v1964 = vmax.f32 %v1359, 0.0
    %v1965 = vmax.f32 %v1362, 0.0
    %v1966 = vmax.f32 %v1365, 0.0
    %v1967 = vmax.f32 %v1368, 0.0
    %v1968 = vmax.f32 %v1371, 0.0
    %v1969 = vmax.f32 %v1374, 0.0
    %v1970 = vmax.f32 %v1377, 0.0
    %v1971 = vmax.f32 %v1380, 0.0
    %v1972 = vmax.f32 %v1383, 0.0
    %v1973 = vmax.f32 %v1386, 0.0
    %v1974 = vmax.f32 %v1389, 0.0
    %v1975 = vmax.f32 %v1392, 0.0
    %v1976 = vmax.f32 %v1395, 0.0
    %v1977 = vmax.f32 %v1398, 0.0
    %v1978 = vmax.f32 %v1401, 0.0
    %v1979 = vmax.f32 %v1404, 0.0
    %v1980 = vmax.f32 %v1407, 0.0
    %v1981 = vmax.f32 %v1410, 0.0
    %v1982 = vmax.f32 %v1413, 0.0
    %v1983 = vmax.f32 %v1416, 0.0
    %v1984 = vmax.f32 %v1419, 0.0
    %v1985 = vmax.f32 %v1422, 0.0
    %v1986 = vmax.f32 %v1425, 0.0
    %v1987 = vmax.f32 %v1428, 0.0
    %v1988 = vmax.f32 %v1431, 0.0
    %v1989 = vmax.f32 %v1434, 0.0
    %v1990 = vmax.f32 %v1437, 0.0
    %v1991 = vmax.f32 %v1440, 0.0
    %v1992 = vmax.f32 %v1443, 0.0
    %v1993 = vmax.f32 %v1446, 0.0
    %v1994 = vmax.f32 %v1449, 0.0
    %v1995 = vmax.f32 %v1452, 0.0
    %v1996 = vmax.f32 %v1455, 0.0
    %v1997 = vmax.f32 %v1458, 0.0
    %v1998 = vmax.f32 %v1461, 0.0
    %v1999 = vmax.f32 %v1464, 0.0
    %v2000 = vmax.f32 %v1467, 0.0
    %v2001 = vmax.f32 %v1470, 0.0
    %v2002 = vmax.f32 %v1473, 0.0
    %v2003 = vmax.f32 %v1476, 0.0
    %v2004 = vmax.f32 %v1479, 0.0
    %v2005 = vmax.f32 %v1482, 0.0
    %v2006 = vmax.f32 %v1485, 0.0
    %v2007 = vmax.f32 %v1488, 0.0
    %v2008 = vmax.f32 %v1491, 0.0
    %v2009 = vmax.f32 %v1494, 0.0
    %v2010 = vmax.f32 %v1497, 0.0
    %v2011 = vmax.f32 %v1500, 0.0
    %v2012 = vmax.f32 %v1503, 0.0
    %v2013 = vmax.f32 %v1506, 0.0
    %v2014 = vmax.f32 %v1509, 0.0
    %v2015 = vmax.f32 %v1512, 0.0
    %v2016 = vmax.f32 %v1515, 0.0
    %v2017 = vmax.f32 %v1518, 0.0
    %v2018 = vmax.f32 %v1521, 0.0
    %v2019 = vmax.f32 %v1524, 0.0
    %v2020 = vmax.f32 %v1527, 0.0
    %v2021 = vmax.f32 %v1530, 0.0
    %v2022 = vmax.f32 %v1533, 0.0
    %v2023 = vmax.f32 %v1536, 0.0
    %v2024 = vmax.f32 %v1539, 0.0
    %v2025 = vmax.f32 %v1542, 0.0
    %v2026 = vmax.f32 %v1545, 0.0
    %v2027 = vmax.f32 %v1548, 0.0
    %v2028 = vmax.f32 %v1551, 0.0
    %v2029 = vmax.f32 %v1554, 0.0
    %v2030 = vmax.f32 %v1557, 0.0
    %v2031 = vmax.f32 %v1560, 0.0
    %v2032 = vmax.f32 %v1563, 0.0
    %v2033 = vmax.f32 %v1566, 0.0
    %v2034 = vmax.f32 %v1569, 0.0
    %v2035 = vmax.f32 %v1572, 0.0
    %v2036 = vmax.f32 %v1575, 0.0
    %v2037 = vmax.f32 %v1578, 0.0
    %v2038 = vmax.f32 %v1581, 0.0
    %v2039 = vmax.f32 %v1584, 0.0
    %v2040 = vmax.f32 %v1587, 0.0
    %v2041 = vmax.f32 %v1590, 0.0
    %v2042 = vmax.f32 %v1593, 0.0
    %v2043 = vmax.f32 %v1596, 0.0
    %v2044 = vmax.f32 %v1599, 0.0
    %v2045 = vmax.f32 %v1602, 0.0
    %v2046 = vmax.f32 %v1605, 0.0
    %v2047 = vmax.f32 %v1608, 0.0
    %v2048 = vmax.f32 %v1611, 0.0
    %v2049 = vmax.f32 %v1614, 0.0
    %v2050 = vmax.f32 %v1617, 0.0
    %v2051 = vmax.f32 %v1620, 0.0
    %v2052 = vmax.f32 %v1623, 0.0
    %v2053 = vmax.f32 %v1626, 0.0
    %v2054 = vmax.f32 %v1629, 0.0
    %v2055 = vmax.f32 %v1632, 0.0
    %v2056 = vmax.f32 %v1635, 0.0
    %v2057 = vmax.f32 %v1638, 0.0
    %v2058 = vmax.f32 %v1641, 0.0
    %v2059 = vmax.f32 %v1644, 0.0
    %v2060 = vmax.f32 %v1647, 0.0
    %v2061 = vmax.f32 %v1650, 0.0
    %v2062 = vmax.f32 %v1653, 0.0
    %v2063 = vmax.f32 %v1656, 0.0
    %v2064 = vmax.f32 %v1659, 0.0
    %v2065 = vmax.f32 %v1662, 0.0
    %v2066 = vmax.f32 %v1665, 0.0
    %v2067 = vmax.f32 %v1668, 0.0
    %v2068 = vmax.f32 %v1671, 0.0
    %v2069 = vmax.f32 %v1674, 0.0
    %v2070 = vmax.f32 %v1677, 0.0
    %v2071 = vmax.f32 %v1680, 0.0
    %v2072 = vmax.f32 %v1683, 0.0
    %v2073 = vmax.f32 %v1686, 0.0
    %v2074 = vmax.f32 %v1689, 0.0
    %v2075 = vmax.f32 %v1692, 0.0
    %v2076 = vmax.f32 %v1695, 0.0
    %v2077 = vmax.f32 %v1698, 0.0
    %v2078 = vmax.f32 %v1701, 0.0
    %v2079 = vmax.f32 %v1704, 0.0
    %v2080 = vmax.f32 %v1707, 0.0
    %v2081 = vmax.f32 %v1710, 0.0
    %v2082 = vmax.f32 %v1713, 0.0
    %v2083 = vmax.f32 %v1716, 0.0
    %v2084 = vmax.f32 %v1719, 0.0
    %v2085 = vmax.f32 %v1722, 0.0
    %v2086 = vmax.f32 %v1725, 0.0
    %v2087 = vmax.f32 %v1728, 0.0
    %v2088 = vmax.f32 %v1731, 0.0
    %v2089 = vmax.f32 %v1734, 0.0
    %v2090 = vmax.f32 %v1737, 0.0
    %v2091 = vmax.f32 %v1740, 0.0
    %v2092 = vmax.f32 %v1743, 0.0
    %v2093 = vmax.f32 %v1746, 0.0
    %v2094 = vmax.f32 %v1749, 0.0
    %v2095 = vmax.f32 %v1752, 0.0
    %v2096 = vmax.f32 %v1755, 0.0
    %v2097 = vmax.f32 %v1758, 0.0
    %v2098 = vmax.f32 %v1761, 0.0
    %v2099 = vmax.f32 %v1764, 0.0
    %v2100 = vmax.f32 %v1767, 0.0
    %v2101 = vmax.f32 %v1770, 0.0
    %v2102 = vmax.f32 %v1773, 0.0
    %v2103 = vmax.f32 %v1776, 0.0
    %v2104 = vmax.f32 %v1779, 0.0
    %v2105 = vmax.f32 %v1782, 0.0
    %v2106 = vmax.f32 %v1785, 0.0
    %v2107 = vmax.f32 %v1788, 0.0
    %v2108 = vmax.f32 %v1791, 0.0
    %v2109 = vmax.f32 %v1794, 0.0
    %v2110 = vmax.f32 %v1797, 0.0
    %v2111 = vmax.f32 %v1800, 0.0
    %v2112 = vmax.f32 %v1803, 0.0
    %v2113 = vmax.f32 %v1806, 0.0
    %v2114 = vmax.f32 %v1809, 0.0
    %v2115 = vmax.f32 %v1812, 0.0
    %v2116 = vmax.f32 %v1815, 0.0
    %v2117 = vmax.f32 %v1818, 0.0
    %v2118 = vmax.f32 %v1821, 0.0
    %v2119 = vmax.f32 %v1824, 0.0
    %v2120 = vmax.f32 %v1827, 0.0
    %v2121 = vmax.f32 %v1830, 0.0
    %v2122 = vmax.f32 %v1833, 0.0
    %v2123 = vmax.f32 %v1836, 0.0
    %v2124 = vmax.f32 %v1839, 0.0
    %v2125 = vmax.f32 %v1842, 0.0
    %v2126 = vmax.f32 %v1845, 0.0
    %v2127 = vmax.f32 %v1848, 0.0
    %v2128 = vmax.f32 %v1851, 0.0
    %v2129 = vmax.f32 %v1854, 0.0
    %v2130 = vmax.f32 %v1857, 0.0
    %v2131 = vmax.f32 %v1860, 0.0
    %v2132 = vmax.f32 %v1863, 0.0
    %v2133 = vmax.f32 %v1866, 0.0
    %v2134 = vmax.f32 %v1869, 0.0
    %v2135 = vmax.f32 %v1872, 0.0
    %v2136 = vmax.f32 %v1875, 0.0
    %v2137 = vmax.f32 %v1878, 0.0
    %v2138 = vmax.f32 %v1881, 0.0
    %v2139 = vlaneseq
    %v2140 = vshrl.u32 %v2139, 7
    %v2141 = vld [vmem:[%s55] sm:$0xff]
    %v2142 = vld [vmem:[%s55 + $0x8] sm:$0xff]
    %v2143 = vperm.slane %v2141, 0
    %v2144 = vperm.slane %v2141, 1
    %v2145 = vperm.slane %v2141, 2
    %v2146 = vperm.slane %v2141, 3
    %v2147 = vperm.slane %v2141, 4
    %v2148 = vperm.slane %v2141, 5
    %v2149 = vperm.slane %v2141, 6
    %v2150 = vperm.slane %v2141, 7
    %v2151 = vperm.slane %v2142, 0
    %v2152 = vperm.slane %v2142, 1
    %v2153 = vperm.slane %v2142, 2
    %v2154 = vperm.slane %v2142, 3
    %v2155 = vperm.slane %v2142, 4
    %v2156 = vperm.slane %v2142, 5
    %v2157 = vperm.slane %v2142, 6
    %v2158 = vperm.slane %v2142, 7
    %vm2159 = vcmp.eq.s32.totalorder %v2140, %v2143
    %vm2160 = vcmp.eq.s32.totalorder %v2140, %v2144
    %vm2161 = vcmp.eq.s32.totalorder %v2140, %v2145
    %vm2162 = vcmp.eq.s32.totalorder %v2140, %v2146
    %vm2163 = vcmp.eq.s32.totalorder %v2140, %v2147
    %vm2164 = vcmp.eq.s32.totalorder %v2140, %v2148
    %vm2165 = vcmp.eq.s32.totalorder %v2140, %v2149
    %vm2166 = vcmp.eq.s32.totalorder %v2140, %v2150
    %vm2167 = vcmp.eq.s32.totalorder %v2140, %v2151
    %vm2168 = vcmp.eq.s32.totalorder %v2140, %v2152
    %vm2169 = vcmp.eq.s32.totalorder %v2140, %v2153
    %vm2170 = vcmp.eq.s32.totalorder %v2140, %v2154
    %vm2171 = vcmp.eq.s32.totalorder %v2140, %v2155
    %vm2172 = vcmp.eq.s32.totalorder %v2140, %v2156
    %vm2173 = vcmp.eq.s32.totalorder %v2140, %v2157
    %vm2174 = vcmp.eq.s32.totalorder %v2140, %v2158
    %v2175 = vsel %vm2159, 1, 0
    %v2176 = vsel %vm2160, 1, 0
    %v2177 = vsel %vm2161, 1, 0
    %v2178 = vsel %vm2162, 1, 0
    %v2179 = vsel %vm2163, 1, 0
    %v2180 = vsel %vm2164, 1, 0
    %v2181 = vsel %vm2165, 1, 0
    %v2182 = vsel %vm2166, 1, 0
    %v2183 = vsel %vm2167, 1, 0
    %v2184 = vsel %vm2168, 1, 0
    %v2185 = vsel %vm2169, 1, 0
    %v2186 = vsel %vm2170, 1, 0
    %v2187 = vsel %vm2171, 1, 0
    %v2188 = vsel %vm2172, 1, 0
    %v2189 = vsel %vm2173, 1, 0
    %v2190 = vsel %vm2174, 1, 0
    %v2191 = vcvt.s32.f32 %v2175
    %v2192 = vcvt.s32.f32 %v2176
    %v2193 = vcvt.s32.f32 %v2177
    %v2194 = vcvt.s32.f32 %v2178
    %v2195 = vcvt.s32.f32 %v2179
    %v2196 = vcvt.s32.f32 %v2180
    %v2197 = vcvt.s32.f32 %v2181
    %v2198 = vcvt.s32.f32 %v2182
    %v2199 = vcvt.s32.f32 %v2183
    %v2200 = vcvt.s32.f32 %v2184
    %v2201 = vcvt.s32.f32 %v2185
    %v2202 = vcvt.s32.f32 %v2186
    %v2203 = vcvt.s32.f32 %v2187
    %v2204 = vcvt.s32.f32 %v2188
    %v2205 = vcvt.s32.f32 %v2189
    %v2206 = vcvt.s32.f32 %v2190
    %v2207 = vld [vmem:[#allocation2] sm:$0xff]
    %2208 = vmatpush.msra.mxu0 %v1898
    %2209 = vmatpush.msra.mxu0 %v1897
    %2210 = vmatpush.msra.mxu0 %v1896
    %2211 = vmatpush.msra.mxu0 %v1895
    %2212 = vmatpush.msra.mxu0 %v1894
    %2213 = vmatpush.msra.mxu0 %v1893
    %2214 = vmatpush.msra.mxu0 %v1892
    %2215 = vmatpush.msra.mxu0 %v1891
    %2216 = vmatpush.msra.mxu0 %v1890
    %2217 = vmatpush.msra.mxu0 %v1889
    %2218 = vmatpush.msra.mxu0 %v1888
    %2219 = vmatpush.msra.mxu0 %v1887
    %2220 = vmatpush.msra.mxu0 %v1886
    %2221 = vmatpush.msra.mxu0 %v1885
    %2222 = vmatpush.msra.mxu0 %v1884
    %2223 = vmatpush.msra.mxu0 %v1883
    %2224 = vmatmul.f32.gmra.mxu0 %v2191
    %v2225 = vpop.f32.mrf.mxu0
    %v2226 = vadd.f32 0.0, %v2225
    %2227 = vdwg.mxu0
    %2228 = vmatpush.msra.mxu0 %v1914
    %2229 = vmatpush.msra.mxu0 %v1913
    %2230 = vmatpush.msra.mxu0 %v1912
    %2231 = vmatpush.msra.mxu0 %v1911
    %2232 = vmatpush.msra.mxu0 %v1910
    %2233 = vmatpush.msra.mxu0 %v1909
    %2234 = vmatpush.msra.mxu0 %v1908
    %2235 = vmatpush.msra.mxu0 %v1907
    %2236 = vmatpush.msra.mxu0 %v1906
    %2237 = vmatpush.msra.mxu0 %v1905
    %2238 = vmatpush.msra.mxu0 %v1904
    %2239 = vmatpush.msra.mxu0 %v1903
    %2240 = vmatpush.msra.mxu0 %v1902
    %2241 = vmatpush.msra.mxu0 %v1901
    %2242 = vmatpush.msra.mxu0 %v1900
    %2243 = vmatpush.msra.mxu0 %v1899
    %2244 = vmatmul.f32.gmra.mxu0 %v2192
    %v2245 = vpop.f32.mrf.mxu0
    %v2246 = vadd.f32 %v2226, %v2245
    %2247 = vdwg.mxu0
    %2248 = vmatpush.msra.mxu0 %v1930
    %2249 = vmatpush.msra.mxu0 %v1929
    %2250 = vmatpush.msra.mxu0 %v1928
    %2251 = vmatpush.msra.mxu0 %v1927
    %2252 = vmatpush.msra.mxu0 %v1926
    %2253 = vmatpush.msra.mxu0 %v1925
    %2254 = vmatpush.msra.mxu0 %v1924
    %2255 = vmatpush.msra.mxu0 %v1923
    %2256 = vmatpush.msra.mxu0 %v1922
    %2257 = vmatpush.msra.mxu0 %v1921
    %2258 = vmatpush.msra.mxu0 %v1920
    %2259 = vmatpush.msra.mxu0 %v1919
    %2260 = vmatpush.msra.mxu0 %v1918
    %2261 = vmatpush.msra.mxu0 %v1917
    %2262 = vmatpush.msra.mxu0 %v1916
    %2263 = vmatpush.msra.mxu0 %v1915
    %2264 = vmatmul.f32.gmra.mxu0 %v2193
    %v2265 = vpop.f32.mrf.mxu0
    %v2266 = vadd.f32 %v2246, %v2265
    %2267 = vdwg.mxu0
    %2268 = vmatpush.msra.mxu0 %v1946
    %2269 = vmatpush.msra.mxu0 %v1945
    %2270 = vmatpush.msra.mxu0 %v1944
    %2271 = vmatpush.msra.mxu0 %v1943
    %2272 = vmatpush.msra.mxu0 %v1942
    %2273 = vmatpush.msra.mxu0 %v1941
    %2274 = vmatpush.msra.mxu0 %v1940
    %2275 = vmatpush.msra.mxu0 %v1939
    %2276 = vmatpush.msra.mxu0 %v1938
    %2277 = vmatpush.msra.mxu0 %v1937
    %2278 = vmatpush.msra.mxu0 %v1936
    %2279 = vmatpush.msra.mxu0 %v1935
    %2280 = vmatpush.msra.mxu0 %v1934
    %2281 = vmatpush.msra.mxu0 %v1933
    %2282 = vmatpush.msra.mxu0 %v1932
    %2283 = vmatpush.msra.mxu0 %v1931
    %2284 = vmatmul.f32.gmra.mxu0 %v2194
    %v2285 = vpop.f32.mrf.mxu0
    %v2286 = vadd.f32 %v2266, %v2285
    %2287 = vdwg.mxu0
    %2288 = vmatpush.msra.mxu0 %v1962
    %2289 = vmatpush.msra.mxu0 %v1961
    %2290 = vmatpush.msra.mxu0 %v1960
    %2291 = vmatpush.msra.mxu0 %v1959
    %2292 = vmatpush.msra.mxu0 %v1958
    %2293 = vmatpush.msra.mxu0 %v1957
    %2294 = vmatpush.msra.mxu0 %v1956
    %2295 = vmatpush.msra.mxu0 %v1955
    %2296 = vmatpush.msra.mxu0 %v1954
    %2297 = vmatpush.msra.mxu0 %v1953
    %2298 = vmatpush.msra.mxu0 %v1952
    %2299 = vmatpush.msra.mxu0 %v1951
    %2300 = vmatpush.msra.mxu0 %v1950
    %2301 = vmatpush.msra.mxu0 %v1949
    %2302 = vmatpush.msra.mxu0 %v1948
    %2303 = vmatpush.msra.mxu0 %v1947
    %2304 = vmatmul.f32.gmra.mxu0 %v2195
    %v2305 = vpop.f32.mrf.mxu0
    %v2306 = vadd.f32 %v2286, %v2305
    %2307 = vdwg.mxu0
    %2308 = vmatpush.msra.mxu0 %v1978
    %2309 = vmatpush.msra.mxu0 %v1977
    %2310 = vmatpush.msra.mxu0 %v1976
    %2311 = vmatpush.msra.mxu0 %v1975
    %2312 = vmatpush.msra.mxu0 %v1974
    %2313 = vmatpush.msra.mxu0 %v1973
    %2314 = vmatpush.msra.mxu0 %v1972
    %2315 = vmatpush.msra.mxu0 %v1971
    %2316 = vmatpush.msra.mxu0 %v1970
    %2317 = vmatpush.msra.mxu0 %v1969
    %2318 = vmatpush.msra.mxu0 %v1968
    %2319 = vmatpush.msra.mxu0 %v1967
    %2320 = vmatpush.msra.mxu0 %v1966
    %2321 = vmatpush.msra.mxu0 %v1965
    %2322 = vmatpush.msra.mxu0 %v1964
    %2323 = vmatpush.msra.mxu0 %v1963
    %2324 = vmatmul.f32.gmra.mxu0 %v2196
    %v2325 = vpop.f32.mrf.mxu0
    %v2326 = vadd.f32 %v2306, %v2325
    %2327 = vdwg.mxu0
    %2328 = vmatpush.msra.mxu0 %v1994
    %2329 = vmatpush.msra.mxu0 %v1993
    %2330 = vmatpush.msra.mxu0 %v1992
    %2331 = vmatpush.msra.mxu0 %v1991
    %2332 = vmatpush.msra.mxu0 %v1990
    %2333 = vmatpush.msra.mxu0 %v1989
    %2334 = vmatpush.msra.mxu0 %v1988
    %2335 = vmatpush.msra.mxu0 %v1987
    %2336 = vmatpush.msra.mxu0 %v1986
    %2337 = vmatpush.msra.mxu0 %v1985
    %2338 = vmatpush.msra.mxu0 %v1984
    %2339 = vmatpush.msra.mxu0 %v1983
    %2340 = vmatpush.msra.mxu0 %v1982
    %2341 = vmatpush.msra.mxu0 %v1981
    %2342 = vmatpush.msra.mxu0 %v1980
    %2343 = vmatpush.msra.mxu0 %v1979
    %2344 = vmatmul.f32.gmra.mxu0 %v2197
    %v2345 = vpop.f32.mrf.mxu0
    %v2346 = vadd.f32 %v2326, %v2345
    %2347 = vdwg.mxu0
    %2348 = vmatpush.msra.mxu0 %v2010
    %2349 = vmatpush.msra.mxu0 %v2009
    %2350 = vmatpush.msra.mxu0 %v2008
    %2351 = vmatpush.msra.mxu0 %v2007
    %2352 = vmatpush.msra.mxu0 %v2006
    %2353 = vmatpush.msra.mxu0 %v2005
    %2354 = vmatpush.msra.mxu0 %v2004
    %2355 = vmatpush.msra.mxu0 %v2003
    %2356 = vmatpush.msra.mxu0 %v2002
    %2357 = vmatpush.msra.mxu0 %v2001
    %2358 = vmatpush.msra.mxu0 %v2000
    %2359 = vmatpush.msra.mxu0 %v1999
    %2360 = vmatpush.msra.mxu0 %v1998
    %2361 = vmatpush.msra.mxu0 %v1997
    %2362 = vmatpush.msra.mxu0 %v1996
    %2363 = vmatpush.msra.mxu0 %v1995
    %2364 = vmatmul.f32.gmra.mxu0 %v2198
    %v2365 = vpop.f32.mrf.mxu0
    %v2366 = vadd.f32 %v2346, %v2365
    %2367 = vdwg.mxu0
    %2368 = vmatpush.msra.mxu0 %v2026
    %2369 = vmatpush.msra.mxu0 %v2025
    %2370 = vmatpush.msra.mxu0 %v2024
    %2371 = vmatpush.msra.mxu0 %v2023
    %2372 = vmatpush.msra.mxu0 %v2022
    %2373 = vmatpush.msra.mxu0 %v2021
    %2374 = vmatpush.msra.mxu0 %v2020
    %2375 = vmatpush.msra.mxu0 %v2019
    %2376 = vmatpush.msra.mxu0 %v2018
    %2377 = vmatpush.msra.mxu0 %v2017
    %2378 = vmatpush.msra.mxu0 %v2016
    %2379 = vmatpush.msra.mxu0 %v2015
    %2380 = vmatpush.msra.mxu0 %v2014
    %2381 = vmatpush.msra.mxu0 %v2013
    %2382 = vmatpush.msra.mxu0 %v2012
    %2383 = vmatpush.msra.mxu0 %v2011
    %2384 = vmatmul.f32.gmra.mxu0 %v2199
    %v2385 = vpop.f32.mrf.mxu0
    %v2386 = vadd.f32 %v2366, %v2385
    %2387 = vdwg.mxu0
    %2388 = vmatpush.msra.mxu0 %v2042
    %2389 = vmatpush.msra.mxu0 %v2041
    %2390 = vmatpush.msra.mxu0 %v2040
    %2391 = vmatpush.msra.mxu0 %v2039
    %2392 = vmatpush.msra.mxu0 %v2038
    %2393 = vmatpush.msra.mxu0 %v2037
    %2394 = vmatpush.msra.mxu0 %v2036
    %2395 = vmatpush.msra.mxu0 %v2035
    %2396 = vmatpush.msra.mxu0 %v2034
    %2397 = vmatpush.msra.mxu0 %v2033
    %2398 = vmatpush.msra.mxu0 %v2032
    %2399 = vmatpush.msra.mxu0 %v2031
    %2400 = vmatpush.msra.mxu0 %v2030
    %2401 = vmatpush.msra.mxu0 %v2029
    %2402 = vmatpush.msra.mxu0 %v2028
    %2403 = vmatpush.msra.mxu0 %v2027
    %2404 = vmatmul.f32.gmra.mxu0 %v2200
    %v2405 = vpop.f32.mrf.mxu0
    %v2406 = vadd.f32 %v2386, %v2405
    %2407 = vdwg.mxu0
    %2408 = vmatpush.msra.mxu0 %v2058
    %2409 = vmatpush.msra.mxu0 %v2057
    %2410 = vmatpush.msra.mxu0 %v2056
    %2411 = vmatpush.msra.mxu0 %v2055
    %2412 = vmatpush.msra.mxu0 %v2054
    %2413 = vmatpush.msra.mxu0 %v2053
    %2414 = vmatpush.msra.mxu0 %v2052
    %2415 = vmatpush.msra.mxu0 %v2051
    %2416 = vmatpush.msra.mxu0 %v2050
    %2417 = vmatpush.msra.mxu0 %v2049
    %2418 = vmatpush.msra.mxu0 %v2048
    %2419 = vmatpush.msra.mxu0 %v2047
    %2420 = vmatpush.msra.mxu0 %v2046
    %2421 = vmatpush.msra.mxu0 %v2045
    %2422 = vmatpush.msra.mxu0 %v2044
    %2423 = vmatpush.msra.mxu0 %v2043
    %2424 = vmatmul.f32.gmra.mxu0 %v2201
    %v2425 = vpop.f32.mrf.mxu0
    %v2426 = vadd.f32 %v2406, %v2425
    %2427 = vdwg.mxu0
    %2428 = vmatpush.msra.mxu0 %v2074
    %2429 = vmatpush.msra.mxu0 %v2073
    %2430 = vmatpush.msra.mxu0 %v2072
    %2431 = vmatpush.msra.mxu0 %v2071
    %2432 = vmatpush.msra.mxu0 %v2070
    %2433 = vmatpush.msra.mxu0 %v2069
    %2434 = vmatpush.msra.mxu0 %v2068
    %2435 = vmatpush.msra.mxu0 %v2067
    %2436 = vmatpush.msra.mxu0 %v2066
    %2437 = vmatpush.msra.mxu0 %v2065
    %2438 = vmatpush.msra.mxu0 %v2064
    %2439 = vmatpush.msra.mxu0 %v2063
    %2440 = vmatpush.msra.mxu0 %v2062
    %2441 = vmatpush.msra.mxu0 %v2061
    %2442 = vmatpush.msra.mxu0 %v2060
    %2443 = vmatpush.msra.mxu0 %v2059
    %2444 = vmatmul.f32.gmra.mxu0 %v2202
    %v2445 = vpop.f32.mrf.mxu0
    %v2446 = vadd.f32 %v2426, %v2445
    %2447 = vdwg.mxu0
    %2448 = vmatpush.msra.mxu0 %v2090
    %2449 = vmatpush.msra.mxu0 %v2089
    %2450 = vmatpush.msra.mxu0 %v2088
    %2451 = vmatpush.msra.mxu0 %v2087
    %2452 = vmatpush.msra.mxu0 %v2086
    %2453 = vmatpush.msra.mxu0 %v2085
    %2454 = vmatpush.msra.mxu0 %v2084
    %2455 = vmatpush.msra.mxu0 %v2083
    %2456 = vmatpush.msra.mxu0 %v2082
    %2457 = vmatpush.msra.mxu0 %v2081
    %2458 = vmatpush.msra.mxu0 %v2080
    %2459 = vmatpush.msra.mxu0 %v2079
    %2460 = vmatpush.msra.mxu0 %v2078
    %2461 = vmatpush.msra.mxu0 %v2077
    %2462 = vmatpush.msra.mxu0 %v2076
    %2463 = vmatpush.msra.mxu0 %v2075
    %2464 = vmatmul.f32.gmra.mxu0 %v2203
    %v2465 = vpop.f32.mrf.mxu0
    %v2466 = vadd.f32 %v2446, %v2465
    %2467 = vdwg.mxu0
    %2468 = vmatpush.msra.mxu0 %v2106
    %2469 = vmatpush.msra.mxu0 %v2105
    %2470 = vmatpush.msra.mxu0 %v2104
    %2471 = vmatpush.msra.mxu0 %v2103
    %2472 = vmatpush.msra.mxu0 %v2102
    %2473 = vmatpush.msra.mxu0 %v2101
    %2474 = vmatpush.msra.mxu0 %v2100
    %2475 = vmatpush.msra.mxu0 %v2099
    %2476 = vmatpush.msra.mxu0 %v2098
    %2477 = vmatpush.msra.mxu0 %v2097
    %2478 = vmatpush.msra.mxu0 %v2096
    %2479 = vmatpush.msra.mxu0 %v2095
    %2480 = vmatpush.msra.mxu0 %v2094
    %2481 = vmatpush.msra.mxu0 %v2093
    %2482 = vmatpush.msra.mxu0 %v2092
    %2483 = vmatpush.msra.mxu0 %v2091
    %2484 = vmatmul.f32.gmra.mxu0 %v2204
    %v2485 = vpop.f32.mrf.mxu0
    %v2486 = vadd.f32 %v2466, %v2485
    %2487 = vdwg.mxu0
    %2488 = vmatpush.msra.mxu0 %v2122
    %2489 = vmatpush.msra.mxu0 %v2121
    %2490 = vmatpush.msra.mxu0 %v2120
    %2491 = vmatpush.msra.mxu0 %v2119
    %2492 = vmatpush.msra.mxu0 %v2118
    %2493 = vmatpush.msra.mxu0 %v2117
    %2494 = vmatpush.msra.mxu0 %v2116
    %2495 = vmatpush.msra.mxu0 %v2115
    %2496 = vmatpush.msra.mxu0 %v2114
    %2497 = vmatpush.msra.mxu0 %v2113
    %2498 = vmatpush.msra.mxu0 %v2112
    %2499 = vmatpush.msra.mxu0 %v2111
    %2500 = vmatpush.msra.mxu0 %v2110
    %2501 = vmatpush.msra.mxu0 %v2109
    %2502 = vmatpush.msra.mxu0 %v2108
    %2503 = vmatpush.msra.mxu0 %v2107
    %2504 = vmatmul.f32.gmra.mxu0 %v2205
    %v2505 = vpop.f32.mrf.mxu0
    %v2506 = vadd.f32 %v2486, %v2505
    %2507 = vdwg.mxu0
    %2508 = vmatpush.msra.mxu0 %v2138
    %2509 = vmatpush.msra.mxu0 %v2137
    %2510 = vmatpush.msra.mxu0 %v2136
    %2511 = vmatpush.msra.mxu0 %v2135
    %2512 = vmatpush.msra.mxu0 %v2134
    %2513 = vmatpush.msra.mxu0 %v2133
    %2514 = vmatpush.msra.mxu0 %v2132
    %2515 = vmatpush.msra.mxu0 %v2131
    %2516 = vmatpush.msra.mxu0 %v2130
    %2517 = vmatpush.msra.mxu0 %v2129
    %2518 = vmatpush.msra.mxu0 %v2128
    %2519 = vmatpush.msra.mxu0 %v2127
    %2520 = vmatpush.msra.mxu0 %v2126
    %2521 = vmatpush.msra.mxu0 %v2125
    %2522 = vmatpush.msra.mxu0 %v2124
    %2523 = vmatpush.msra.mxu0 %v2123
    %2524 = vmatmul.f32.gmra.mxu0 %v2206
    %v2525 = vpop.f32.mrf.mxu0
    %v2526 = vadd.f32 %v2506, %v2525
    %2527 = vdwg.mxu0
    %v2528 = vadd.f32 %v2207, %v2526
    %vm2529 = vcmask 261120
    %2530 = vst.msk [vmem:[#allocation2] sm:$0xff] %vm2529, %v2528
    // Predicated region
    $region22: #{tpu_custom_call.1} parent=1 // pred_check
      _
    $region23: #{tpu_custom_call.1} parent=1 // pred_check_branch
      %2532 = sbr.rel (0) target = $region25
    $region24: #{tpu_custom_call.1} parent=1 // pred_region
      %2534 = vsyncadd [#allocation3], 0
      %s2536 = sshll.u32 [#allocation2], 4
      %s2537 = int_to_ptr.vmem [resolvable:$true] %s2536
      %s2538 = sshll.u32 %s4, 4
      %s2539 = int_to_ptr.hbm [resolvable:$true] %s2538
      %2541 = dma.vmem_to_hbm [thread:$0]  %s2537, 128, %s2539, [#allocation3]
    $region25: #{tpu_custom_call.1} parent=1 // pred_fallthru
      _
    // Predicated region
    $region26: #{tpu_custom_call.1} parent=1 // pred_check
      _
    $region27: #{tpu_custom_call.1} parent=1 // pred_check_branch
      %2543 = sbr.rel (0) target = $region29
    $region28: #{tpu_custom_call.1} parent=1 // pred_region
      %2545 = dma.done [#allocation3], 128
    $region29: #{tpu_custom_call.1} parent=1 // pred_fallthru
      _
    %2546 = vsyncpa [#allocation3], 1

</llo_original>
